<compile_context>
chip_gen: v6e
topology: v6e:2x2x1
jax: 0.10.0
libtpu: 0.0.40
codegen_flags: <defaults>
</compile_context>

<pallas_src>
import functools

import jax
import jax.numpy as jnp
from jax import lax
from jax.experimental import pallas as pl
from jax.experimental.pallas import tpu as pltpu


def _round_up(x, m):
    return -(-x // m) * m


# ----------------------------- fused Pallas kernel -----------------------------

def _dot_t(x, w, compute_dtype):
    """x @ w.T with f32 accumulation; MXU inputs cast to compute_dtype (no-op if pre-cast)."""
    return lax.dot_general(
        x.astype(compute_dtype), w.astype(compute_dtype),
        dimension_numbers=(((1,), (1,)), ((), ())),
        preferred_element_type=jnp.float32)


def _parser_upper_kernel(x_ref, mlp_w_ref, mlp_b_ref,
                         arc_wm_ref, arc_wb_ref, lab_wm_ref, lab_wb_ref,
                         out_ref,
                         mlp_scr, rhs_scr,
                         *, a, r, T, L, lj, bb, compute_dtype):
    d_mlp = 2 * (a + r)
    scr_dtype = mlp_scr.dtype
    jt = pl.program_id(1)

    # ---- cold path: once per batch-group (jt == 0); results persist in VMEM scratch.
    # NOTE: relies on the j axis being the INNER, "arbitrary" grid axis so that
    # jt == 0 executes before every other jt of the same batch group.
    @pl.when(jt == 0)
    def _():
        rhs_scr[...] = jnp.zeros(rhs_scr.shape, scr_dtype)
        mlp_w = mlp_w_ref[...]
        mlp_b = mlp_b_ref[...]
        arc_wm = arc_wm_ref[...]
        arc_wb = arc_wb_ref[...]
        for bi in range(bb):                                         # static unroll, bb small
            xb = x_ref[bi]                                           # (L, 2H)
            y = _dot_t(xb, mlp_w, compute_dtype) + mlp_b             # (L, d_mlp), f32
            act = jnp.where(y >= 0.0, y, 0.1 * y)                    # LeakyReLU(0.1)
            # LHS slab: [mlp activations | 1] -- the ones column carries the folded
            # label head-side ("input2 ones") bias through the fused matmul.
            mlp_scr[bi] = jnp.concatenate(
                [act, jnp.ones((L, 1), jnp.float32)], axis=1).astype(scr_dtype)

            arc_dep = act[:, :a]
            lab_dep = act[:, 2 * a:2 * a + r]

            # arc dep-side affine -> RHS rows [0, L), columns [a, 2a) (= arc_head cols).
            arc_aff = _dot_t(arc_dep, arc_wm, compute_dtype) + arc_wb          # (L, a)
            rhs_scr[bi, 0:L, a:2 * a] = arc_aff.astype(scr_dtype)

            # label dep-side affines -> RHS rows [L + o*L, L + (o+1)*L).
            for o in range(T):
                aff = (_dot_t(lab_dep, lab_wm_ref[o], compute_dtype)
                       + lab_wb_ref[o])                                        # (L, r+2)
                row0 = (1 + o) * L
                rhs_scr[bi, row0:row0 + L, 2 * a + r:2 * a + 2 * r] = (
                    aff[:, :r].astype(scr_dtype))
                # head-side "ones" bias, folded into the extra contraction column.
                rhs_scr[bi, row0:row0 + L, d_mlp:d_mlp + 1] = (
                    aff[:, r:r + 1] + aff[:, r + 1:r + 2]).astype(scr_dtype)

    # ---- hot path: ONE matmul + ONE full-width lane-dense store per batch row ----
    j0 = pl.multiple_of(jt * lj, lj)
    for bi in range(bb):                                             # static unroll
        lhs = mlp_scr[bi, pl.ds(j0, lj), :]                          # (lj, Kc)
        out_ref[bi] = _dot_t(lhs, rhs_scr[bi], compute_dtype).astype(out_ref.dtype)


# ----------------------------- model / wrappers -----------------------------

class Conf:
    lstm_hidden_dim = 16          # 2H = 32
    mlp_output_dim_arc = 16
    mlp_output_dim_rel = 16


def init_params(key, conf, label_size):
    """Parameters in PyTorch nn.Linear layout (Dout, Din)."""
    a, r = conf.mlp_output_dim_arc, conf.mlp_output_dim_rel
    two_h = 2 * conf.lstm_hidden_dim
    d_mlp = 2 * (a + r)
    ks = jax.random.split(key, 4)
    return {
        # MLPLayer: Linear(2H -> 2*(a+r)) with bias, LeakyReLU(0.1)
        "mlp_w": 0.1 * jax.random.normal(ks[0], (d_mlp, two_h), jnp.float32),
        "mlp_b": 0.1 * jax.random.normal(ks[1], (d_mlp,), jnp.float32),
        # BiAffineLayer arc: Linear(a+1 -> 1*(a+0)), no bias param, bias_dim=(1, 0)
        "arc_w": 0.1 * jax.random.normal(ks[2], (1 * (a + 0), a + 1), jnp.float32),
        # BiAffineLayer label: Linear(r+2 -> label_size*(r+2)), no bias, bias_dim=(2, 2)
        "label_w": 0.1 * jax.random.normal(ks[3], (label_size * (r + 2), r + 2), jnp.float32),
    }


def prepare_kernel_params(params, conf, label_size):
    """One-time weight preprocessing (at init, NOT per forward): fold the biaffine
    input1 'ones' columns into additive row vectors and reorder label_w to
    (label, d2b, d1_real).  No transposes or reshapes needed later."""
    a, r, T = conf.mlp_output_dim_arc, conf.mlp_output_dim_rel, label_size
    d_mlp = 2 * (a + r)
    arc_w = params["arc_w"]                                   # (a, a+1)
    lab_w3 = params["label_w"].reshape(T, r + 2, r + 2)       # (T, d2b, d1b)
    return {
        "mlp_w": params["mlp_w"],                             # (D, 2H)
        "mlp_b": params["mlp_b"].reshape(1, d_mlp),
        "arc_w_main": arc_w[:, :a],                           # (a, a)
        "arc_w_bias": arc_w[:, a:].sum(axis=1).reshape(1, a),
        "lab_w_main": lab_w3[:, :, :r],                       # (T, r+2, r)
        "lab_w_bias": lab_w3[:, :, r:].sum(axis=2).reshape(T, 1, r + 2),
    }


def _vmem_capacity_bytes():
    try:
        info = pltpu.get_tpu_info()
        cap = int(getattr(info, "vmem_capacity_bytes", 0))
        if cap > 0:
            return cap
    except Exception:
        pass
    return 64 * 1024 * 1024        # conservative (v7x per-TC size)


def parser_upper_forward(kparams, conf, label_size, x, *, lj_tile=None, bb=None,
                         compute_dtype=jnp.float32):
    """x: (L, B, 2*lstm_hidden_dim), sequence-major like the PyTorch module (eval mode)."""
    # TODO(synk): training-mode drop_sequence_shared_mask dropout is not implemented
    # (eval-mode forward only; the helper is not defined in the provided module).
    L, B, two_h = x.shape
    a, r, T = conf.mlp_output_dim_arc, conf.mlp_output_dim_rel, label_size
    d_mlp = 2 * (a + r)
    Kc = d_mlp + 1                       # + "ones" column carrying the folded head bias
    W = (1 + T) * L                      # arc block (L lanes) + T label blocks (L lanes)
    W_pad = _round_up(W, 128)            # lane-dense, unmasked stores / full-width DMA
    scr_itemsize = jnp.dtype(compute_dtype).itemsize
    cap = _vmem_capacity_bytes()

    def est_bytes(bbc, ljc):
        lane = lambda c: _round_up(c, 128)
        out_db = 2 * bbc * ljc * W_pad * 4                                  # out double buffer
        in_db = 2 * bbc * L * lane(two_h) * 4                               # x double buffer
        w_db = 2 * 4 * (d_mlp * lane(two_h) + 8 * lane(d_mlp) + a * lane(a)
                        + 8 * lane(a) + T * (r + 2) * lane(r) + T * 8 * lane(r + 2))
        mlp_s = bbc * _round_up(L, 16) * lane(Kc) * scr_itemsize
        rhs_s = bbc * _round_up(W_pad, 16) * lane(Kc) * scr_itemsize
        return out_db + in_db + w_db + mlp_s + rhs_s + (2 << 20)

    # Pick (lj, bb) from the VMEM budget: largest j-tile first, then the largest batch
    # block; keep the parallel grid extent >= 2 so v7x megacore stays balanced.
    budget = int(cap * 0.8)
    lj_cands = ([lj_tile] if lj_tile is not None else
                [L] + [t for t in (4096, 2048, 1024, 512, 256, 128, 64, 32, 16, 8)
                       if t < L and L % t == 0])
    bb_max = max(1, B // 2)
    bb_cands = ([bb] if bb is not None else
                [d for d in range(bb_max, 0, -1) if B % d == 0])
    pick = None
    for ljc in lj_cands:
        for bbc in bb_cands:
            if est_bytes(bbc, ljc) <= budget:
                pick = (ljc, bbc)
                break
        if pick is not None:
            break
    if pick is None:
        pick = (lj_cands[-1], bb_cands[-1])
    lj_tile, bb = pick

    assert B % bb == 0
    assert L % lj_tile == 0 and (lj_tile % 8 == 0 or lj_tile == L)
    n_j = L // lj_tile

    x_bm = jnp.transpose(x, (1, 0, 2))    # single layout change: batch-major end-to-end

    cd = compute_dtype
    mlp_w = kparams["mlp_w"].astype(cd)   # pre-cast MXU weight operands once
    arc_wm = kparams["arc_w_main"].astype(cd)
    lab_wm = kparams["lab_w_main"].astype(cd)
    mlp_b = kparams["mlp_b"]              # bias adds / LeakyReLU stay f32
    arc_wb = kparams["arc_w_bias"]
    lab_wb = kparams["lab_w_bias"]

    kernel = functools.partial(
        _parser_upper_kernel, a=a, r=r, T=T, L=L, lj=lj_tile, bb=bb, compute_dtype=cd)

    vmem_limit = int(min(cap, max(int(est_bytes(bb, lj_tile) * 1.25), 32 * 1024 * 1024)))

    cost = pl.CostEstimate(
        flops=int(2 * B * L * W_pad * Kc
                  + 2 * B * L * (two_h * d_mlp + a * a + T * r * (r + 2))),
        transcendentals=0,
        bytes_accessed=int(B * L * W_pad * 4 + B * L * two_h * 4),
    )

    slab = pl.pallas_call(
        kernel,
        out_shape=jax.ShapeDtypeStruct((B, L, W_pad), jnp.float32),
        grid=(B // bb, n_j),
        in_specs=[
            pl.BlockSpec((bb, L, two_h), lambda b, jt: (b, 0, 0)),
            pl.BlockSpec((d_mlp, two_h), lambda b, jt: (0, 0)),
            pl.BlockSpec((1, d_mlp), lambda b, jt: (0, 0)),
            pl.BlockSpec((a, a), lambda b, jt: (0, 0)),
            pl.BlockSpec((1, a), lambda b, jt: (0, 0)),
            pl.BlockSpec((T, r + 2, r), lambda b, jt: (0, 0, 0)),
            pl.BlockSpec((T, 1, r + 2), lambda b, jt: (0, 0, 0)),
        ],
        out_specs=pl.BlockSpec((bb, lj_tile, W_pad), lambda b, jt: (b, jt, 0)),
        scratch_shapes=[
            pltpu.VMEM((bb, L, Kc), cd),         # [mlp activations | 1] per batch row
            pltpu.VMEM((bb, W_pad, Kc), cd),     # fused arc+label biaffine RHS (zero padded)
        ],
        compiler_params=pltpu.CompilerParams(
            dimension_semantics=("parallel", "arbitrary"),
            vmem_limit_bytes=vmem_limit,
        ),
        cost_estimate=cost,
    )(x_bm, mlp_w, mlp_b, arc_wm, arc_wb, lab_wm, lab_wb)

    # split the lane-dense slab once: [:, :, :L] = arc, [:, :, L:W] is (label, i)-major.
    arc_scores = slab[:, :, :L]                                              # (B, Lj, Li)
    # TODO(synk): downstream consumers could read the (label, i)-major slab directly and
    # skip this transpose (it costs one extra HBM read+write of the label tensor).
    label_scores = slab[:, :, L:W].reshape(B, L, T, L).transpose(0, 1, 3, 2)  # (B, Lj, Li, T)
    return arc_scores, label_scores


# ----------------------------- pure-JAX reference -----------------------------

def _ref_biaffine(input1, input2, weight, out_dim, bias_dim):
    B, L, _ = input1.shape
    if bias_dim[0] > 0:
        input1 = jnp.concatenate([input1, jnp.ones((B, L, bias_dim[0]), input1.dtype)], axis=2)
    if bias_dim[1] > 0:
        input2 = jnp.concatenate([input2, jnp.ones((B, L, bias_dim[1]), input2.dtype)], axis=2)
    d2b = input2.shape[2]
    affine = jnp.einsum("bim,cm->bic", input1, weight)        # Linear, no bias
    affine = affine.reshape(B, L * out_dim, d2b)
    bi = jnp.einsum("bmk,bjk->bjm", affine, input2)           # bmm(affine, in2^T).transpose(1,2)
    return bi.reshape(B, L, L, out_dim)


def parser_upper_forward_ref(params, conf, label_size, x):
    a, r = conf.mlp_output_dim_arc, conf.mlp_output_dim_rel
    y = x @ params["mlp_w"].T + params["mlp_b"]
    mlp_out = jnp.where(y >= 0, y, 0.1 * y)                   # LeakyReLU(0.1), eval mode
    mlp_out = jnp.transpose(mlp_out, (1, 0, 2))               # (B, L, D)
    arc_dep = mlp_out[..., :a]
    arc_head = mlp_out[..., a:2 * a]
    lab_dep = mlp_out[..., 2 * a:2 * a + r]
    lab_head = mlp_out[..., 2 * a + r:]
    arc = jnp.squeeze(_ref_biaffine(arc_dep, arc_head, params["arc_w"], 1, (1, 0)), axis=3)
    lab = _ref_biaffine(lab_dep, lab_head, params["label_w"], label_size, (2, 2))
    return arc, lab


# ----------------------------- main -----------------------------

if __name__ == "__main__":
    conf = Conf()
    label_size = 5
    L, B = 16, 2

    key = jax.random.PRNGKey(0)
    kp, kx = jax.random.split(key)
    params = init_params(kp, conf, label_size)
    kparams = prepare_kernel_params(params, conf, label_size)   # one-time weight prep
    x = jax.random.normal(kx, (L, B, 2 * conf.lstm_hidden_dim), jnp.float32)

    ref_arc, ref_lab = parser_upper_forward_ref(params, conf, label_size, x)

    # auto-tiled f32 path (picks lj = L, bb from the VMEM budget)
    arc_scores, label_scores = parser_upper_forward(kparams, conf, label_size, x)
    arc_scores, label_scores = jax.block_until_ready((arc_scores, label_scores))
    assert arc_scores.shape == (B, L, L)
    assert label_scores.shape == (B, L, L, label_size)
    assert jnp.allclose(arc_scores, ref_arc, atol=2e-3, rtol=2e-3)
    assert jnp.allclose(label_scores, ref_lab, atol=2e-3, rtol=2e-3)

    # forced j-tiling (exercises the scratch-carry across j-tiles: grid = (2, 2))
    arc_t, lab_t = parser_upper_forward(kparams, conf, label_size, x, lj_tile=8)
    arc_t, lab_t = jax.block_until_ready((arc_t, lab_t))
    assert jnp.allclose(arc_t, ref_arc, atol=2e-3, rtol=2e-3)
    assert jnp.allclose(lab_t, ref_lab, atol=2e-3, rtol=2e-3)

    # bf16 MXU-input path (bf16 scratch, f32 accumulation / elementwise) vs f32 reference
    arc16, lab16 = parser_upper_forward(
        kparams, conf, label_size, x, lj_tile=8, compute_dtype=jnp.bfloat16)
    arc16, lab16 = jax.block_until_ready((arc16, lab16))
    assert jnp.allclose(arc16, ref_arc, atol=5e-2, rtol=5e-2)
    assert jnp.allclose(lab16, ref_lab, atol=5e-2, rtol=5e-2)

    print("KERNEL_OK")
</pallas_src>

<mosaic_0001>
module attributes {stable_mosaic.version = 11 : i64} {
  func.func @_parser_upper_kernel(%arg0: i32, %arg1: i32, %arg2: memref<1x16x32xf32, #tpu.memory_space<vmem>>, %arg3: memref<64x32xf32, #tpu.memory_space<vmem>>, %arg4: memref<1x64xf32, #tpu.memory_space<vmem>>, %arg5: memref<16x16xf32, #tpu.memory_space<vmem>>, %arg6: memref<1x16xf32, #tpu.memory_space<vmem>>, %arg7: memref<5x18x16xf32, #tpu.memory_space<vmem>>, %arg8: memref<5x1x18xf32, #tpu.memory_space<vmem>>, %arg9: memref<1x16x128xf32, #tpu.memory_space<vmem>>, %arg10: memref<1x16x65xf32, #tpu.memory_space<vmem>>, %arg11: memref<1x128x65xf32, #tpu.memory_space<vmem>>) attributes {dimension_semantics = [#tpu.dimension_semantics<parallel>, #tpu.dimension_semantics<arbitrary>], iteration_bounds = array<i64: 2, 1>, scalar_prefetch = 0 : i64, scratch_operands = 2 : i64, tpu.core_type = #tpu.core_type<tc>, window_params = [{transform_indices = @transform_0, window_bounds = array<i64: 1, 16, 32>}, {pipeline_mode = #tpu.pipeline_mode<synchronous>, transform_indices = @transform_1, window_bounds = array<i64: 64, 32>}, {pipeline_mode = #tpu.pipeline_mode<synchronous>, transform_indices = @transform_2, window_bounds = array<i64: 1, 64>}, {pipeline_mode = #tpu.pipeline_mode<synchronous>, transform_indices = @transform_3, window_bounds = array<i64: 16, 16>}, {pipeline_mode = #tpu.pipeline_mode<synchronous>, transform_indices = @transform_4, window_bounds = array<i64: 1, 16>}, {pipeline_mode = #tpu.pipeline_mode<synchronous>, transform_indices = @transform_5, window_bounds = array<i64: 5, 18, 16>}, {pipeline_mode = #tpu.pipeline_mode<synchronous>, transform_indices = @transform_6, window_bounds = array<i64: 5, 1, 18>}, {transform_indices = @transform_7, window_bounds = array<i64: 1, 16, 128>}]} {
    %c0_i32 = arith.constant 0 : i32
    %0 = arith.cmpi eq, %arg1, %c0_i32 : i32
    %1 = arith.extui %0 : i1 to i32
    %c0_i32_0 = arith.constant 0 : i32
    %2 = arith.cmpi ne, %1, %c0_i32_0 : i32
    scf.if %2 {
      %cst_8 = arith.constant 0.000000e+00 : f32
      %14 = vector.broadcast %cst_8 : f32 to vector<1x128x65xf32>
      %c0_9 = arith.constant 0 : index
      %c0_10 = arith.constant 0 : index
      %c0_11 = arith.constant 0 : index
      %15 = vector.load %arg11[%c0_9, %c0_10, %c0_11] : memref<1x128x65xf32, #tpu.memory_space<vmem>>, vector<1x128x65xf32>
      tpu.vector_store %arg11[%c0_9, %c0_10, %c0_11], %14 {strides = array<i32>} : memref<1x128x65xf32, #tpu.memory_space<vmem>>, vector<1x128x65xf32>,
      %c0_12 = arith.constant 0 : index
      %c0_13 = arith.constant 0 : index
      %16 = vector.load %arg3[%c0_12, %c0_13] : memref<64x32xf32, #tpu.memory_space<vmem>>, vector<64x32xf32>
      %c0_14 = arith.constant 0 : index
      %c0_15 = arith.constant 0 : index
      %17 = vector.load %arg4[%c0_14, %c0_15] : memref<1x64xf32, #tpu.memory_space<vmem>>, vector<1x64xf32>
      %c0_16 = arith.constant 0 : index
      %c0_17 = arith.constant 0 : index
      %18 = vector.load %arg5[%c0_16, %c0_17] : memref<16x16xf32, #tpu.memory_space<vmem>>, vector<16x16xf32>
      %c0_18 = arith.constant 0 : index
      %c0_19 = arith.constant 0 : index
      %19 = vector.load %arg6[%c0_18, %c0_19] : memref<1x16xf32, #tpu.memory_space<vmem>>, vector<1x16xf32>
      %c0_20 = arith.constant 0 : index
      %c0_21 = arith.constant 0 : index
      %c0_22 = arith.constant 0 : index
      %20 = vector.load %arg2[%c0_20, %c0_21, %c0_22] : memref<1x16x32xf32, #tpu.memory_space<vmem>>, vector<1x16x32xf32>
      %21 = vector.shape_cast %20 : vector<1x16x32xf32> to vector<16x32xf32>
      %cst_23 = arith.constant dense<0.000000e+00> : vector<16x64xf32>
      %22 = tpu.matmul %21, %16, %cst_23 {dimension_numbers = #tpu.dot_dimension_numbers<[1], [1], [0], [0], [0, 0, 1, 0], [], []>} : vector<16x32xf32>, vector<64x32xf32>, vector<16x64xf32> -> vector<16x64xf32>
      %23 = vector.broadcast %17 : vector<1x64xf32> to vector<16x64xf32>
      %24 = arith.addf %22, %23 : vector<16x64xf32>
      %cst_24 = arith.constant 0.000000e+00 : f32
      %25 = vector.broadcast %cst_24 : f32 to vector<16x64xf32>
      %26 = arith.cmpf oge, %24, %25 : vector<16x64xf32>
      %cst_25 = arith.constant 1.000000e-01 : f32
      %27 = vector.broadcast %cst_25 : f32 to vector<16x64xf32>
      %28 = arith.mulf %27, %24 : vector<16x64xf32>
      %29 = arith.select %26, %24, %28 : vector<16x64xi1>, vector<16x64xf32>
      %cst_26 = arith.constant 1.000000e+00 : f32
      %30 = vector.broadcast %cst_26 : f32 to vector<16x1xf32>
      %31 = tpu.concatenate %29, %30 in 1 : vector<16x64xf32>, vector<16x1xf32> -> vector<16x65xf32>
      %c0_27 = arith.constant 0 : index
      %c0_28 = arith.constant 0 : index
      %c0_29 = arith.constant 0 : index
      %32 = vector.load %arg10[%c0_27, %c0_28, %c0_29] : memref<1x16x65xf32, #tpu.memory_space<vmem>>, vector<1x16x65xf32>
      %33 = vector.shape_cast %32 : vector<1x16x65xf32> to vector<16x65xf32>
      %34 = vector.shape_cast %31 : vector<16x65xf32> to vector<1x16x65xf32>
      tpu.vector_store %arg10[%c0_27, %c0_28, %c0_29], %34 {strides = array<i32>} : memref<1x16x65xf32, #tpu.memory_space<vmem>>, vector<1x16x65xf32>,
      %35 = vector.extract_strided_slice %29 {offsets = [0, 0], sizes = [16, 16], strides = [1, 1]} : vector<16x64xf32> to vector<16x16xf32>
      %36 = vector.extract_strided_slice %29 {offsets = [0, 32], sizes = [16, 16], strides = [1, 1]} : vector<16x64xf32> to vector<16x16xf32>
      %cst_30 = arith.constant dense<0.000000e+00> : vector<16x16xf32>
      %37 = tpu.matmul %35, %18, %cst_30 {dimension_numbers = #tpu.dot_dimension_numbers<[1], [1], [0], [0], [0, 0, 1, 0], [], []>} : vector<16x16xf32>, vector<16x16xf32>, vector<16x16xf32> -> vector<16x16xf32>
      %38 = vector.broadcast %19 : vector<1x16xf32> to vector<16x16xf32>
      %39 = arith.addf %37, %38 : vector<16x16xf32>
      %c0_31 = arith.constant 0 : index
      %c0_32 = arith.constant 0 : index
      %c16 = arith.constant 16 : index
      %40 = vector.load %arg11[%c0_31, %c0_32, %c16] : memref<1x128x65xf32, #tpu.memory_space<vmem>>, vector<1x16x16xf32>
      %41 = vector.shape_cast %40 : vector<1x16x16xf32> to vector<16x16xf32>
      %42 = vector.shape_cast %39 : vector<16x16xf32> to vector<1x16x16xf32>
      tpu.vector_store %arg11[%c0_31, %c0_32, %c16], %42 {strides = array<i32>} : memref<1x128x65xf32, #tpu.memory_space<vmem>>, vector<1x16x16xf32>,
      %c0_33 = arith.constant 0 : index
      %c0_34 = arith.constant 0 : index
      %c0_35 = arith.constant 0 : index
      %43 = vector.load %arg7[%c0_33, %c0_34, %c0_35] : memref<5x18x16xf32, #tpu.memory_space<vmem>>, vector<1x18x16xf32>
      %44 = vector.shape_cast %43 : vector<1x18x16xf32> to vector<18x16xf32>
      %cst_36 = arith.constant dense<0.000000e+00> : vector<16x18xf32>
      %45 = tpu.matmul %36, %44, %cst_36 {dimension_numbers = #tpu.dot_dimension_numbers<[1], [1], [0], [0], [0, 0, 1, 0], [], []>} : vector<16x16xf32>, vector<18x16xf32>, vector<16x18xf32> -> vector<16x18xf32>
      %c0_37 = arith.constant 0 : index
      %c0_38 = arith.constant 0 : index
      %c0_39 = arith.constant 0 : index
      %46 = vector.load %arg8[%c0_37, %c0_38, %c0_39] : memref<5x1x18xf32, #tpu.memory_space<vmem>>, vector<1x1x18xf32>
      %47 = vector.shape_cast %46 : vector<1x1x18xf32> to vector<1x18xf32>
      %48 = vector.broadcast %47 : vector<1x18xf32> to vector<16x18xf32>
      %49 = arith.addf %45, %48 : vector<16x18xf32>
      %50 = vector.extract_strided_slice %49 {offsets = [0, 0], sizes = [16, 16], strides = [1, 1]} : vector<16x18xf32> to vector<16x16xf32>
      %c0_40 = arith.constant 0 : index
      %c16_41 = arith.constant 16 : index
      %c48 = arith.constant 48 : index
      %51 = vector.load %arg11[%c0_40, %c16_41, %c48] : memref<1x128x65xf32, #tpu.memory_space<vmem>>, vector<1x16x16xf32>
      %52 = vector.shape_cast %51 : vector<1x16x16xf32> to vector<16x16xf32>
      %53 = vector.shape_cast %50 : vector<16x16xf32> to vector<1x16x16xf32>
      tpu.vector_store %arg11[%c0_40, %c16_41, %c48], %53 {strides = array<i32>} : memref<1x128x65xf32, #tpu.memory_space<vmem>>, vector<1x16x16xf32>,
      %54 = vector.extract_strided_slice %49 {offsets = [0, 16], sizes = [16, 1], strides = [1, 1]} : vector<16x18xf32> to vector<16x1xf32>
      %55 = vector.extract_strided_slice %49 {offsets = [0, 17], sizes = [16, 1], strides = [1, 1]} : vector<16x18xf32> to vector<16x1xf32>
      %56 = arith.addf %54, %55 : vector<16x1xf32>
      %c0_42 = arith.constant 0 : index
      %c16_43 = arith.constant 16 : index
      %c64 = arith.constant 64 : index
      %57 = vector.load %arg11[%c0_42, %c16_43, %c64] : memref<1x128x65xf32, #tpu.memory_space<vmem>>, vector<1x16x1xf32>
      %58 = vector.shape_cast %57 : vector<1x16x1xf32> to vector<16x1xf32>
      %59 = vector.shape_cast %56 : vector<16x1xf32> to vector<1x16x1xf32>
      tpu.vector_store %arg11[%c0_42, %c16_43, %c64], %59 {strides = array<i32>} : memref<1x128x65xf32, #tpu.memory_space<vmem>>, vector<1x16x1xf32>,
      %c1 = arith.constant 1 : index
      %c0_44 = arith.constant 0 : index
      %c0_45 = arith.constant 0 : index
      %60 = vector.load %arg7[%c1, %c0_44, %c0_45] : memref<5x18x16xf32, #tpu.memory_space<vmem>>, vector<1x18x16xf32>
      %61 = vector.shape_cast %60 : vector<1x18x16xf32> to vector<18x16xf32>
      %cst_46 = arith.constant dense<0.000000e+00> : vector<16x18xf32>
      %62 = tpu.matmul %36, %61, %cst_46 {dimension_numbers = #tpu.dot_dimension_numbers<[1], [1], [0], [0], [0, 0, 1, 0], [], []>} : vector<16x16xf32>, vector<18x16xf32>, vector<16x18xf32> -> vector<16x18xf32>
      %c1_47 = arith.constant 1 : index
      %c0_48 = arith.constant 0 : index
      %c0_49 = arith.constant 0 : index
      %63 = vector.load %arg8[%c1_47, %c0_48, %c0_49] : memref<5x1x18xf32, #tpu.memory_space<vmem>>, vector<1x1x18xf32>
      %64 = vector.shape_cast %63 : vector<1x1x18xf32> to vector<1x18xf32>
      %65 = vector.broadcast %64 : vector<1x18xf32> to vector<16x18xf32>
      %66 = arith.addf %62, %65 : vector<16x18xf32>
      %67 = vector.extract_strided_slice %66 {offsets = [0, 0], sizes = [16, 16], strides = [1, 1]} : vector<16x18xf32> to vector<16x16xf32>
      %c0_50 = arith.constant 0 : index
      %c32 = arith.constant 32 : index
      %c48_51 = arith.constant 48 : index
      %68 = vector.load %arg11[%c0_50, %c32, %c48_51] : memref<1x128x65xf32, #tpu.memory_space<vmem>>, vector<1x16x16xf32>
      %69 = vector.shape_cast %68 : vector<1x16x16xf32> to vector<16x16xf32>
      %70 = vector.shape_cast %67 : vector<16x16xf32> to vector<1x16x16xf32>
      tpu.vector_store %arg11[%c0_50, %c32, %c48_51], %70 {strides = array<i32>} : memref<1x128x65xf32, #tpu.memory_space<vmem>>, vector<1x16x16xf32>,
      %71 = vector.extract_strided_slice %66 {offsets = [0, 16], sizes = [16, 1], strides = [1, 1]} : vector<16x18xf32> to vector<16x1xf32>
      %72 = vector.extract_strided_slice %66 {offsets = [0, 17], sizes = [16, 1], strides = [1, 1]} : vector<16x18xf32> to vector<16x1xf32>
      %73 = arith.addf %71, %72 : vector<16x1xf32>
      %c0_52 = arith.constant 0 : index
      %c32_53 = arith.constant 32 : index
      %c64_54 = arith.constant 64 : index
      %74 = vector.load %arg11[%c0_52, %c32_53, %c64_54] : memref<1x128x65xf32, #tpu.memory_space<vmem>>, vector<1x16x1xf32>
      %75 = vector.shape_cast %74 : vector<1x16x1xf32> to vector<16x1xf32>
      %76 = vector.shape_cast %73 : vector<16x1xf32> to vector<1x16x1xf32>
      tpu.vector_store %arg11[%c0_52, %c32_53, %c64_54], %76 {strides = array<i32>} : memref<1x128x65xf32, #tpu.memory_space<vmem>>, vector<1x16x1xf32>,
      %c2 = arith.constant 2 : index
      %c0_55 = arith.constant 0 : index
      %c0_56 = arith.constant 0 : index
      %77 = vector.load %arg7[%c2, %c0_55, %c0_56] : memref<5x18x16xf32, #tpu.memory_space<vmem>>, vector<1x18x16xf32>
      %78 = vector.shape_cast %77 : vector<1x18x16xf32> to vector<18x16xf32>
      %cst_57 = arith.constant dense<0.000000e+00> : vector<16x18xf32>
      %79 = tpu.matmul %36, %78, %cst_57 {dimension_numbers = #tpu.dot_dimension_numbers<[1], [1], [0], [0], [0, 0, 1, 0], [], []>} : vector<16x16xf32>, vector<18x16xf32>, vector<16x18xf32> -> vector<16x18xf32>
      %c2_58 = arith.constant 2 : index
      %c0_59 = arith.constant 0 : index
      %c0_60 = arith.constant 0 : index
      %80 = vector.load %arg8[%c2_58, %c0_59, %c0_60] : memref<5x1x18xf32, #tpu.memory_space<vmem>>, vector<1x1x18xf32>
      %81 = vector.shape_cast %80 : vector<1x1x18xf32> to vector<1x18xf32>
      %82 = vector.broadcast %81 : vector<1x18xf32> to vector<16x18xf32>
      %83 = arith.addf %79, %82 : vector<16x18xf32>
      %84 = vector.extract_strided_slice %83 {offsets = [0, 0], sizes = [16, 16], strides = [1, 1]} : vector<16x18xf32> to vector<16x16xf32>
      %c0_61 = arith.constant 0 : index
      %c48_62 = arith.constant 48 : index
      %c48_63 = arith.constant 48 : index
      %85 = vector.load %arg11[%c0_61, %c48_62, %c48_63] : memref<1x128x65xf32, #tpu.memory_space<vmem>>, vector<1x16x16xf32>
      %86 = vector.shape_cast %85 : vector<1x16x16xf32> to vector<16x16xf32>
      %87 = vector.shape_cast %84 : vector<16x16xf32> to vector<1x16x16xf32>
      tpu.vector_store %arg11[%c0_61, %c48_62, %c48_63], %87 {strides = array<i32>} : memref<1x128x65xf32, #tpu.memory_space<vmem>>, vector<1x16x16xf32>,
      %88 = vector.extract_strided_slice %83 {offsets = [0, 16], sizes = [16, 1], strides = [1, 1]} : vector<16x18xf32> to vector<16x1xf32>
      %89 = vector.extract_strided_slice %83 {offsets = [0, 17], sizes = [16, 1], strides = [1, 1]} : vector<16x18xf32> to vector<16x1xf32>
      %90 = arith.addf %88, %89 : vector<16x1xf32>
      %c0_64 = arith.constant 0 : index
      %c48_65 = arith.constant 48 : index
      %c64_66 = arith.constant 64 : index
      %91 = vector.load %arg11[%c0_64, %c48_65, %c64_66] : memref<1x128x65xf32, #tpu.memory_space<vmem>>, vector<1x16x1xf32>
      %92 = vector.shape_cast %91 : vector<1x16x1xf32> to vector<16x1xf32>
      %93 = vector.shape_cast %90 : vector<16x1xf32> to vector<1x16x1xf32>
      tpu.vector_store %arg11[%c0_64, %c48_65, %c64_66], %93 {strides = array<i32>} : memref<1x128x65xf32, #tpu.memory_space<vmem>>, vector<1x16x1xf32>,
      %c3 = arith.constant 3 : index
      %c0_67 = arith.constant 0 : index
      %c0_68 = arith.constant 0 : index
      %94 = vector.load %arg7[%c3, %c0_67, %c0_68] : memref<5x18x16xf32, #tpu.memory_space<vmem>>, vector<1x18x16xf32>
      %95 = vector.shape_cast %94 : vector<1x18x16xf32> to vector<18x16xf32>
      %cst_69 = arith.constant dense<0.000000e+00> : vector<16x18xf32>
      %96 = tpu.matmul %36, %95, %cst_69 {dimension_numbers = #tpu.dot_dimension_numbers<[1], [1], [0], [0], [0, 0, 1, 0], [], []>} : vector<16x16xf32>, vector<18x16xf32>, vector<16x18xf32> -> vector<16x18xf32>
      %c3_70 = arith.constant 3 : index
      %c0_71 = arith.constant 0 : index
      %c0_72 = arith.constant 0 : index
      %97 = vector.load %arg8[%c3_70, %c0_71, %c0_72] : memref<5x1x18xf32, #tpu.memory_space<vmem>>, vector<1x1x18xf32>
      %98 = vector.shape_cast %97 : vector<1x1x18xf32> to vector<1x18xf32>
      %99 = vector.broadcast %98 : vector<1x18xf32> to vector<16x18xf32>
      %100 = arith.addf %96, %99 : vector<16x18xf32>
      %101 = vector.extract_strided_slice %100 {offsets = [0, 0], sizes = [16, 16], strides = [1, 1]} : vector<16x18xf32> to vector<16x16xf32>
      %c0_73 = arith.constant 0 : index
      %c64_74 = arith.constant 64 : index
      %c48_75 = arith.constant 48 : index
      %102 = vector.load %arg11[%c0_73, %c64_74, %c48_75] : memref<1x128x65xf32, #tpu.memory_space<vmem>>, vector<1x16x16xf32>
      %103 = vector.shape_cast %102 : vector<1x16x16xf32> to vector<16x16xf32>
      %104 = vector.shape_cast %101 : vector<16x16xf32> to vector<1x16x16xf32>
      tpu.vector_store %arg11[%c0_73, %c64_74, %c48_75], %104 {strides = array<i32>} : memref<1x128x65xf32, #tpu.memory_space<vmem>>, vector<1x16x16xf32>,
      %105 = vector.extract_strided_slice %100 {offsets = [0, 16], sizes = [16, 1], strides = [1, 1]} : vector<16x18xf32> to vector<16x1xf32>
      %106 = vector.extract_strided_slice %100 {offsets = [0, 17], sizes = [16, 1], strides = [1, 1]} : vector<16x18xf32> to vector<16x1xf32>
      %107 = arith.addf %105, %106 : vector<16x1xf32>
      %c0_76 = arith.constant 0 : index
      %c64_77 = arith.constant 64 : index
      %c64_78 = arith.constant 64 : index
      %108 = vector.load %arg11[%c0_76, %c64_77, %c64_78] : memref<1x128x65xf32, #tpu.memory_space<vmem>>, vector<1x16x1xf32>
      %109 = vector.shape_cast %108 : vector<1x16x1xf32> to vector<16x1xf32>
      %110 = vector.shape_cast %107 : vector<16x1xf32> to vector<1x16x1xf32>
      tpu.vector_store %arg11[%c0_76, %c64_77, %c64_78], %110 {strides = array<i32>} : memref<1x128x65xf32, #tpu.memory_space<vmem>>, vector<1x16x1xf32>,
      %c4 = arith.constant 4 : index
      %c0_79 = arith.constant 0 : index
      %c0_80 = arith.constant 0 : index
      %111 = vector.load %arg7[%c4, %c0_79, %c0_80] : memref<5x18x16xf32, #tpu.memory_space<vmem>>, vector<1x18x16xf32>
      %112 = vector.shape_cast %111 : vector<1x18x16xf32> to vector<18x16xf32>
      %cst_81 = arith.constant dense<0.000000e+00> : vector<16x18xf32>
      %113 = tpu.matmul %36, %112, %cst_81 {dimension_numbers = #tpu.dot_dimension_numbers<[1], [1], [0], [0], [0, 0, 1, 0], [], []>} : vector<16x16xf32>, vector<18x16xf32>, vector<16x18xf32> -> vector<16x18xf32>
      %c4_82 = arith.constant 4 : index
      %c0_83 = arith.constant 0 : index
      %c0_84 = arith.constant 0 : index
      %114 = vector.load %arg8[%c4_82, %c0_83, %c0_84] : memref<5x1x18xf32, #tpu.memory_space<vmem>>, vector<1x1x18xf32>
      %115 = vector.shape_cast %114 : vector<1x1x18xf32> to vector<1x18xf32>
      %116 = vector.broadcast %115 : vector<1x18xf32> to vector<16x18xf32>
      %117 = arith.addf %113, %116 : vector<16x18xf32>
      %118 = vector.extract_strided_slice %117 {offsets = [0, 0], sizes = [16, 16], strides = [1, 1]} : vector<16x18xf32> to vector<16x16xf32>
      %c0_85 = arith.constant 0 : index
      %c80 = arith.constant 80 : index
      %c48_86 = arith.constant 48 : index
      %119 = vector.load %arg11[%c0_85, %c80, %c48_86] : memref<1x128x65xf32, #tpu.memory_space<vmem>>, vector<1x16x16xf32>
      %120 = vector.shape_cast %119 : vector<1x16x16xf32> to vector<16x16xf32>
      %121 = vector.shape_cast %118 : vector<16x16xf32> to vector<1x16x16xf32>
      tpu.vector_store %arg11[%c0_85, %c80, %c48_86], %121 {strides = array<i32>} : memref<1x128x65xf32, #tpu.memory_space<vmem>>, vector<1x16x16xf32>,
      %122 = vector.extract_strided_slice %117 {offsets = [0, 16], sizes = [16, 1], strides = [1, 1]} : vector<16x18xf32> to vector<16x1xf32>
      %123 = vector.extract_strided_slice %117 {offsets = [0, 17], sizes = [16, 1], strides = [1, 1]} : vector<16x18xf32> to vector<16x1xf32>
      %124 = arith.addf %122, %123 : vector<16x1xf32>
      %c0_87 = arith.constant 0 : index
      %c80_88 = arith.constant 80 : index
      %c64_89 = arith.constant 64 : index
      %125 = vector.load %arg11[%c0_87, %c80_88, %c64_89] : memref<1x128x65xf32, #tpu.memory_space<vmem>>, vector<1x16x1xf32>
      %126 = vector.shape_cast %125 : vector<1x16x1xf32> to vector<16x1xf32>
      %127 = vector.shape_cast %124 : vector<16x1xf32> to vector<1x16x1xf32>
      tpu.vector_store %arg11[%c0_87, %c80_88, %c64_89], %127 {strides = array<i32>} : memref<1x128x65xf32, #tpu.memory_space<vmem>>, vector<1x16x1xf32>,
    } else {
    }
    %c16_i32 = arith.constant 16 : i32
    %3 = arith.muli %arg1, %c16_i32 : i32
    %4 = tpu.assume_multiple %3, 16 : i32
    %c0 = arith.constant 0 : index
    %5 = arith.index_cast %4 : i32 to index
    %c0_1 = arith.constant 0 : index
    %6 = vector.load %arg10[%c0, %5, %c0_1] : memref<1x16x65xf32, #tpu.memory_space<vmem>>, vector<1x16x65xf32>
    %7 = vector.shape_cast %6 : vector<1x16x65xf32> to vector<16x65xf32>
    %c0_2 = arith.constant 0 : index
    %c0_3 = arith.constant 0 : index
    %c0_4 = arith.constant 0 : index
    %8 = vector.load %arg11[%c0_2, %c0_3, %c0_4] : memref<1x128x65xf32, #tpu.memory_space<vmem>>, vector<1x128x65xf32>
    %9 = vector.shape_cast %8 : vector<1x128x65xf32> to vector<128x65xf32>
    %cst = arith.constant dense<0.000000e+00> : vector<16x128xf32>
    %10 = tpu.matmul %7, %9, %cst {dimension_numbers = #tpu.dot_dimension_numbers<[1], [1], [0], [0], [0, 0, 1, 0], [], []>} : vector<16x65xf32>, vector<128x65xf32>, vector<16x128xf32> -> vector<16x128xf32>
    %c0_5 = arith.constant 0 : index
    %c0_6 = arith.constant 0 : index
    %c0_7 = arith.constant 0 : index
    %11 = vector.load %arg9[%c0_5, %c0_6, %c0_7] : memref<1x16x128xf32, #tpu.memory_space<vmem>>, vector<1x16x128xf32>
    %12 = vector.shape_cast %11 : vector<1x16x128xf32> to vector<16x128xf32>
    %13 = vector.shape_cast %10 : vector<16x128xf32> to vector<1x16x128xf32>
    tpu.vector_store %arg9[%c0_5, %c0_6, %c0_7], %13 {strides = array<i32>} : memref<1x16x128xf32, #tpu.memory_space<vmem>>, vector<1x16x128xf32>,
    return
  }
  func.func @transform_0(%arg0: i32, %arg1: i32) -> (i32, i32, i32) {
    %c0_i32 = arith.constant 0 : i32
    %c0_i32_0 = arith.constant 0 : i32
    %c0_i32_1 = arith.constant 0 : i32
    return %arg0, %c0_i32, %c0_i32_0 : i32, i32, i32
  }
  func.func @transform_1(%arg0: i32, %arg1: i32) -> (i32, i32) {
    %c0_i32 = arith.constant 0 : i32
    %c0_i32_0 = arith.constant 0 : i32
    %c0_i32_1 = arith.constant 0 : i32
    return %c0_i32, %c0_i32_0 : i32, i32
  }
  func.func @transform_2(%arg0: i32, %arg1: i32) -> (i32, i32) {
    %c0_i32 = arith.constant 0 : i32
    %c0_i32_0 = arith.constant 0 : i32
    %c0_i32_1 = arith.constant 0 : i32
    return %c0_i32, %c0_i32_0 : i32, i32
  }
  func.func @transform_3(%arg0: i32, %arg1: i32) -> (i32, i32) {
    %c0_i32 = arith.constant 0 : i32
    %c0_i32_0 = arith.constant 0 : i32
    %c0_i32_1 = arith.constant 0 : i32
    return %c0_i32, %c0_i32_0 : i32, i32
  }
  func.func @transform_4(%arg0: i32, %arg1: i32) -> (i32, i32) {
    %c0_i32 = arith.constant 0 : i32
    %c0_i32_0 = arith.constant 0 : i32
    %c0_i32_1 = arith.constant 0 : i32
    return %c0_i32, %c0_i32_0 : i32, i32
  }
  func.func @transform_5(%arg0: i32, %arg1: i32) -> (i32, i32, i32) {
    %c0_i32 = arith.constant 0 : i32
    %c0_i32_0 = arith.constant 0 : i32
    %c0_i32_1 = arith.constant 0 : i32
    %c0_i32_2 = arith.constant 0 : i32
    return %c0_i32, %c0_i32_0, %c0_i32_1 : i32, i32, i32
  }
  func.func @transform_6(%arg0: i32, %arg1: i32) -> (i32, i32, i32) {
    %c0_i32 = arith.constant 0 : i32
    %c0_i32_0 = arith.constant 0 : i32
    %c0_i32_1 = arith.constant 0 : i32
    %c0_i32_2 = arith.constant 0 : i32
    return %c0_i32, %c0_i32_0, %c0_i32_1 : i32, i32, i32
  }
  func.func @transform_7(%arg0: i32, %arg1: i32) -> (i32, i32, i32) {
    %c0_i32 = arith.constant 0 : i32
    %c0_i32_0 = arith.constant 0 : i32
    return %arg0, %arg1, %c0_i32 : i32, i32, i32
  }
}

</mosaic_0001>

<llo_original>
// kernel: tpu_custom_call.1
$region0: #{tpu_custom_call.1}
  #allocation0 [shape = 'u32[]', space=smem, size = 0x4, offset = 0x4, fixed_abs, tag = 'smem constant byte address 0x4 - core index']
  #allocation1 [shape = 'u32[144,128]{1,0:T(1,128)}', space=vmem, size = 0x12000, scoped, tag = 'internal scratch']
  #allocation2 [shape = 'f32[1,16,65]{2,1,0:T(8,128)}', space=vmem, size = 0x2000, scoped, tag = 'scratch operand']
  #allocation3 [shape = 'f32[1,128,65]{2,1,0:T(8,128)}', space=vmem, size = 0x10000, scoped, tag = 'scratch operand']
  %s0 = inlined_call_operand.vmem [shape: f32[2,16,32], index: 0, kind: input, shape index: {}]
  %s1 = inlined_call_operand.vmem [shape: f32[64,32], index: 1, kind: input, shape index: {}]
  %s2 = inlined_call_operand.vmem [shape: f32[1,64], index: 2, kind: input, shape index: {}]
  %s3 = inlined_call_operand.vmem [shape: f32[16,16], index: 3, kind: input, shape index: {}]
  %s4 = inlined_call_operand.vmem [shape: f32[1,16], index: 4, kind: input, shape index: {}]
  %s5 = inlined_call_operand.vmem [shape: f32[5,18,16], index: 5, kind: input, shape index: {}]
  %s6 = inlined_call_operand.vmem [shape: f32[5,1,18], index: 6, kind: input, shape index: {}]
  %s7 = inlined_call_operand.hbm [shape: f32[2,16,128], index: 7, kind: output, shape index: {}]
  %s8 = sld [smem:[#allocation0]]
  $region65: #{tpu_custom_call.1} parent=0
    _
  %s10 = ssub.s32 1, %s8
  %s11 = scalar_select 0, %s10, %s8
  $region1: #{tpu_custom_call.1} parent=0
    #allocation4 [shape = 'u8[16384]{0}', space=vmem, size = 0x4000, scoped, tag = 'output window, operand 0']
    #allocation5 [shape = 's32[2]{0}', space=sflag, size = 0x8, scoped, tag = 'scoped memory for tpu_custom_call.1']
    %12 = vsyncpa [#allocation5], 0
    %s13 = scalar_lea.sflag [#allocation5], 1
    %14 = vsyncpa %s13, 0
    loop: start=0, step=1, limit=4
    $region2: #{tpu_custom_call.1} parent=1 // loop_pre_header
      _
    $region3: #{tpu_custom_call.1} parent=1 // loop_header
      %s16 = sphi 0, %s20
      %p17 = scmp.ge.s32.totalorder %s16, 4
      %s23 = sphi 0, %s35
      %s24 = sphi 0, %s31
      %s25 = sphi 0, %s23
      %s26 = sphi 0, %s24
      %s27 = sphi 0, %s25
      %s28 = sphi 0, %s26
      %s38 = sphi 0, %s40
      %s41 = sphi 0, %s38
      %s42 = sphi 0, %s41
      %s58 = sphi 0, %s42
      %s62 = sphi 0, %s62
      %s64 = sphi 0, %s62
      %s65 = sphi 0, %s64
      %s79 = sphi 0, %s65
      %s83 = sphi 0, %s83
      %s85 = sphi 0, %s83
      %s86 = sphi 0, %s85
      %s100 = sphi 0, %s86
      %s104 = sphi 0, %s104
      %s106 = sphi 0, %s104
      %s107 = sphi 0, %s106
      %s121 = sphi 0, %s107
      %s125 = sphi 0, %s125
      %s127 = sphi 0, %s125
      %s128 = sphi 0, %s127
      %s142 = sphi 0, %s128
      %s146 = sphi 0, %s146
      %s148 = sphi 0, %s146
      %s149 = sphi 0, %s148
      %s163 = sphi 0, %s149
      %s167 = sphi 0, %s167
      %s169 = sphi 0, %s167
      %s170 = sphi 0, %s169
      %s184 = sphi 0, %s170
      %s192 = sphi 0, %s194
      %s195 = sphi 0, %s192
      %s196 = sphi 0, %s195
      %s212 = sphi 0, %s196
    $region4: #{tpu_custom_call.1} parent=1 // loop_header_branch
      %19 = sbr.rel (%p17) target = $region8
    $region5: #{tpu_custom_call.1} parent=1 // loop_body
      %s21 = ssub.s32 %s16, 1
      %s22 = ssub.s32 %s16, 2
      %s29 = sadd.s32 1, %s24
      %p30 = scmp.ge.s32.totalorder %s29, 1
      %s31 = scalar_select %p30, 0, %s29
      %s32 = sadd.s32 1, %s23
      %s33 = scalar_select %p30, %s32, %s23
      %p34 = scmp.ge.s32.totalorder %s33, 2
      %s35 = scalar_select %p34, 0, %s33
      %s36 = ssub.s32 %s23, %s35
      %p37 = scmp.eq.s32.totalorder %s36, 0
      %s39 = sadd.s32 %s38, 1
      %s40 = scalar_select %p37, %s38, %s39
      %p43 = pneg %p37
      %p44 = scmp.eq.s32.totalorder %s16, 1
      %p45 = por %p43, %p44
      %p46 = scmp.ne.s32.totalorder %s38, %s41
      %p47 = scmp.eq.s32.totalorder %s16, 0
      %p48 = por %p46, %p47
      %p49 = scmp.ne.s32.totalorder %s38, %s41
      %p50 = scmp.eq.s32.totalorder %s21, 1
      %p51 = por %p49, %p50
      %p52 = scmp.ne.s32.totalorder %s41, %s42
      %p53 = scmp.eq.s32.totalorder %s21, 0
      %p54 = por %p52, %p53
      %p55 = scmp.ne.s32.totalorder %s41, %s42
      %p56 = scmp.eq.s32.totalorder %s22, 1
      %p57 = por %p55, %p56
      %p59 = scmp.ne.s32.totalorder %s42, %s58
      %p60 = scmp.eq.s32.totalorder %s22, 0
      %p61 = por %p59, %p60
      %s63 = sadd.s32 %s62, 1
      %p66 = scmp.eq.s32.totalorder %s16, 1
      %p67 = scmp.ne.s32.totalorder %s62, %s64
      %p68 = scmp.eq.s32.totalorder %s16, 0
      %p69 = por %p67, %p68
      %p70 = scmp.ne.s32.totalorder %s62, %s64
      %p71 = scmp.eq.s32.totalorder %s21, 1
      %p72 = por %p70, %p71
      %p73 = scmp.ne.s32.totalorder %s64, %s65
      %p74 = scmp.eq.s32.totalorder %s21, 0
      %p75 = por %p73, %p74
      %p76 = scmp.ne.s32.totalorder %s64, %s65
      %p77 = scmp.eq.s32.totalorder %s22, 1
      %p78 = por %p76, %p77
      %p80 = scmp.ne.s32.totalorder %s65, %s79
      %p81 = scmp.eq.s32.totalorder %s22, 0
      %p82 = por %p80, %p81
      %s84 = sadd.s32 %s83, 1
      %p87 = scmp.eq.s32.totalorder %s16, 1
      %p88 = scmp.ne.s32.totalorder %s83, %s85
      %p89 = scmp.eq.s32.totalorder %s16, 0
      %p90 = por %p88, %p89
      %p91 = scmp.ne.s32.totalorder %s83, %s85
      %p92 = scmp.eq.s32.totalorder %s21, 1
      %p93 = por %p91, %p92
      %p94 = scmp.ne.s32.totalorder %s85, %s86
      %p95 = scmp.eq.s32.totalorder %s21, 0
      %p96 = por %p94, %p95
      %p97 = scmp.ne.s32.totalorder %s85, %s86
      %p98 = scmp.eq.s32.totalorder %s22, 1
      %p99 = por %p97, %p98
      %p101 = scmp.ne.s32.totalorder %s86, %s100
      %p102 = scmp.eq.s32.totalorder %s22, 0
      %p103 = por %p101, %p102
      %s105 = sadd.s32 %s104, 1
      %p108 = scmp.eq.s32.totalorder %s16, 1
      %p109 = scmp.ne.s32.totalorder %s104, %s106
      %p110 = scmp.eq.s32.totalorder %s16, 0
      %p111 = por %p109, %p110
      %p112 = scmp.ne.s32.totalorder %s104, %s106
      %p113 = scmp.eq.s32.totalorder %s21, 1
      %p114 = por %p112, %p113
      %p115 = scmp.ne.s32.totalorder %s106, %s107
      %p116 = scmp.eq.s32.totalorder %s21, 0
      %p117 = por %p115, %p116
      %p118 = scmp.ne.s32.totalorder %s106, %s107
      %p119 = scmp.eq.s32.totalorder %s22, 1
      %p120 = por %p118, %p119
      %p122 = scmp.ne.s32.totalorder %s107, %s121
      %p123 = scmp.eq.s32.totalorder %s22, 0
      %p124 = por %p122, %p123
      %s126 = sadd.s32 %s125, 1
      %p129 = scmp.eq.s32.totalorder %s16, 1
      %p130 = scmp.ne.s32.totalorder %s125, %s127
      %p131 = scmp.eq.s32.totalorder %s16, 0
      %p132 = por %p130, %p131
      %p133 = scmp.ne.s32.totalorder %s125, %s127
      %p134 = scmp.eq.s32.totalorder %s21, 1
      %p135 = por %p133, %p134
      %p136 = scmp.ne.s32.totalorder %s127, %s128
      %p137 = scmp.eq.s32.totalorder %s21, 0
      %p138 = por %p136, %p137
      %p139 = scmp.ne.s32.totalorder %s127, %s128
      %p140 = scmp.eq.s32.totalorder %s22, 1
      %p141 = por %p139, %p140
      %p143 = scmp.ne.s32.totalorder %s128, %s142
      %p144 = scmp.eq.s32.totalorder %s22, 0
      %p145 = por %p143, %p144
      %s147 = sadd.s32 %s146, 1
      %p150 = scmp.eq.s32.totalorder %s16, 1
      %p151 = scmp.ne.s32.totalorder %s146, %s148
      %p152 = scmp.eq.s32.totalorder %s16, 0
      %p153 = por %p151, %p152
      %p154 = scmp.ne.s32.totalorder %s146, %s148
      %p155 = scmp.eq.s32.totalorder %s21, 1
      %p156 = por %p154, %p155
      %p157 = scmp.ne.s32.totalorder %s148, %s149
      %p158 = scmp.eq.s32.totalorder %s21, 0
      %p159 = por %p157, %p158
      %p160 = scmp.ne.s32.totalorder %s148, %s149
      %p161 = scmp.eq.s32.totalorder %s22, 1
      %p162 = por %p160, %p161
      %p164 = scmp.ne.s32.totalorder %s149, %s163
      %p165 = scmp.eq.s32.totalorder %s22, 0
      %p166 = por %p164, %p165
      %s168 = sadd.s32 %s167, 1
      %p171 = scmp.eq.s32.totalorder %s16, 1
      %p172 = scmp.ne.s32.totalorder %s167, %s169
      %p173 = scmp.eq.s32.totalorder %s16, 0
      %p174 = por %p172, %p173
      %p175 = scmp.ne.s32.totalorder %s167, %s169
      %p176 = scmp.eq.s32.totalorder %s21, 1
      %p177 = por %p175, %p176
      %p178 = scmp.ne.s32.totalorder %s169, %s170
      %p179 = scmp.eq.s32.totalorder %s21, 0
      %p180 = por %p178, %p179
      %p181 = scmp.ne.s32.totalorder %s169, %s170
      %p182 = scmp.eq.s32.totalorder %s22, 1
      %p183 = por %p181, %p182
      %p185 = scmp.ne.s32.totalorder %s170, %s184
      %p186 = scmp.eq.s32.totalorder %s22, 0
      %p187 = por %p185, %p186
      %s188 = ssub.s32 %s23, %s35
      %s189 = ssub.s32 %s24, %s31
      %s190 = sor.u32 %s188, %s189
      %p191 = scmp.eq.s32.totalorder %s190, 0
      %s193 = sadd.s32 %s192, 1
      %s194 = scalar_select %p191, %s192, %s193
      %p197 = pneg %p191
      %p198 = scmp.eq.s32.totalorder %s16, 1
      %p199 = por %p197, %p198
      %p200 = scmp.ne.s32.totalorder %s192, %s195
      %p201 = scmp.eq.s32.totalorder %s16, 0
      %p202 = por %p200, %p201
      %p203 = scmp.ne.s32.totalorder %s192, %s195
      %p204 = scmp.eq.s32.totalorder %s21, 1
      %p205 = por %p203, %p204
      %p206 = scmp.ne.s32.totalorder %s195, %s196
      %p207 = scmp.eq.s32.totalorder %s21, 0
      %p208 = por %p206, %p207
      %p209 = scmp.ne.s32.totalorder %s195, %s196
      %p210 = scmp.eq.s32.totalorder %s22, 1
      %p211 = por %p209, %p210
      %p213 = scmp.ne.s32.totalorder %s196, %s212
      %p214 = scmp.eq.s32.totalorder %s22, 0
      %p215 = por %p213, %p214
      %p216 = scmp.le.s32.totalorder 1, %s16
      %p217 = scmp.lt.s32.totalorder %s16, 3
      %p218 = pnand %p216, %p217
      %p219 = pneg %p218
      // Predicated region
      $region9: #{tpu_custom_call.1} parent=5 // pred_check
        _
      $region10: #{tpu_custom_call.1} parent=5 // pred_check_branch
        %221 = sbr.rel (%p218) target = $region12
      $region11: #{tpu_custom_call.1} parent=5 // pred_region
        %s222 = ssub.s32 %s16, 1
        // Predicated region
        $region13: #{tpu_custom_call.1} parent=11 // pred_check
          %p223 = pneg %p75
        $region14: #{tpu_custom_call.1} parent=11 // pred_check_branch
          %225 = sbr.rel (%p223) target = $region16
        $region15: #{tpu_custom_call.1} parent=11 // pred_region
          _
        $region16: #{tpu_custom_call.1} parent=11 // pred_fallthru
          _
        // Predicated region
        $region17: #{tpu_custom_call.1} parent=11 // pred_check
          %p226 = pneg %p96
        $region18: #{tpu_custom_call.1} parent=11 // pred_check_branch
          %228 = sbr.rel (%p226) target = $region20
        $region19: #{tpu_custom_call.1} parent=11 // pred_region
          _
        $region20: #{tpu_custom_call.1} parent=11 // pred_fallthru
          _
        // Predicated region
        $region21: #{tpu_custom_call.1} parent=11 // pred_check
          %p229 = pneg %p117
        $region22: #{tpu_custom_call.1} parent=11 // pred_check_branch
          %231 = sbr.rel (%p229) target = $region24
        $region23: #{tpu_custom_call.1} parent=11 // pred_region
          _
        $region24: #{tpu_custom_call.1} parent=11 // pred_fallthru
          _
        // Predicated region
        $region25: #{tpu_custom_call.1} parent=11 // pred_check
          %p232 = pneg %p138
        $region26: #{tpu_custom_call.1} parent=11 // pred_check_branch
          %234 = sbr.rel (%p232) target = $region28
        $region27: #{tpu_custom_call.1} parent=11 // pred_region
          _
        $region28: #{tpu_custom_call.1} parent=11 // pred_fallthru
          _
        // Predicated region
        $region29: #{tpu_custom_call.1} parent=11 // pred_check
          %p235 = pneg %p159
        $region30: #{tpu_custom_call.1} parent=11 // pred_check_branch
          %237 = sbr.rel (%p235) target = $region32
        $region31: #{tpu_custom_call.1} parent=11 // pred_region
          _
        $region32: #{tpu_custom_call.1} parent=11 // pred_fallthru
          _
        // Predicated region
        $region33: #{tpu_custom_call.1} parent=11 // pred_check
          %p238 = pneg %p180
        $region34: #{tpu_custom_call.1} parent=11 // pred_check_branch
          %240 = sbr.rel (%p238) target = $region36
        $region35: #{tpu_custom_call.1} parent=11 // pred_region
          _
        $region36: #{tpu_custom_call.1} parent=11 // pred_fallthru
          _
      $region12: #{tpu_custom_call.1} parent=5 // pred_fallthru
        _
      %p241 = scmp.lt.s32.totalorder %s16, 2
      // Predicated region
      $region37: #{tpu_custom_call.1} parent=5 // pred_check
        %p242 = pneg %p241
      $region38: #{tpu_custom_call.1} parent=5 // pred_check_branch
        %244 = sbr.rel (%p242) target = $region40
      $region39: #{tpu_custom_call.1} parent=5 // pred_region
        // Predicated region
        $region41: #{tpu_custom_call.1} parent=39 // pred_check
          %p245 = pneg %p48
        $region42: #{tpu_custom_call.1} parent=39 // pred_check_branch
          %247 = sbr.rel (%p245) target = $region44
        $region43: #{tpu_custom_call.1} parent=39 // pred_region
          %p248 = scmp.lt.s32.totalorder %s23, 1
          %s249 = scalar_select %p248, %s23, 1
          %s250 = smul.addr %s249, 2
          %s251 = smul.addr %s250, 8
          %s252 = scalar_lea.vmem %s0, %s251
        $region44: #{tpu_custom_call.1} parent=39 // pred_fallthru
          _
      $region40: #{tpu_custom_call.1} parent=5 // pred_fallthru
        _
      %p253 = scmp.le.s32.totalorder 1, %s16
      %p254 = scmp.lt.s32.totalorder %s16, 3
      %p255 = pnand %p253, %p254
      %p256 = pneg %p255
      // Predicated region
      $region45: #{tpu_custom_call.1} parent=5 // pred_check
        _
      $region46: #{tpu_custom_call.1} parent=5 // pred_check_branch
        %258 = sbr.rel (%p255) target = $region48
      $region47: #{tpu_custom_call.1} parent=5 // pred_region
        %s259 = ssub.s32 %s16, 1
        %p260 = scmp.lt.s32.totalorder %s25, 1
        %s261 = scalar_select %p260, %s25, 1
        %s262 = smul.addr %s261, 2
        %s263 = smul.addr %s262, 8
        %s264 = scalar_lea.vmem %s0, %s263
        %p265 = pneg %p54
        %p266 = pneg %p51
        %p267 = pneg %p75
        %p268 = pneg %p72
        %p269 = pneg %p96
        %p270 = pneg %p93
        %p271 = pneg %p117
        %p272 = pneg %p114
        %p273 = pneg %p138
        %p274 = pneg %p135
        %p275 = pneg %p159
        %p276 = pneg %p156
        %p277 = pneg %p180
        %p278 = pneg %p177
        %p279 = pneg %p208
        %p280 = pneg %p205
        %s281 = sand.u32 %s195, 1
        %s282 = scalar_lea.sflag [#allocation5], %s281
        %s283 = sand.u32 %s195, 1
        %s284 = smul.addr %s283, 16
        %s285 = scalar_lea.vmem [#allocation4], %s284
        %p286 = scmp.lt.s32.totalorder %s25, 1
        %s287 = scalar_select %p286, %s25, 1
        %s288 = smul.addr %s287, 2
        %s289 = smul.addr %s288, 8
        %s290 = scalar_lea.vmem %s0, %s289
        %s291 = smul.u32 2, %s26
        %p292 = scmp.eq.s32.totalorder %s26, 0
        // Predicated region
        $region49: #{tpu_custom_call.1} parent=47 // pred_check
          %p293 = pneg %p292
        $region50: #{tpu_custom_call.1} parent=47 // pred_check_branch
          %295 = sbr.rel (%p293) target = $region52
        $region51: #{tpu_custom_call.1} parent=47 // pred_region
          %vm296 = vcmask 531456
          %297 = vst.msk [vmem:[#allocation3] sm:$0xff] %vm296, 0.0
          %298 = vst.msk [vmem:[#allocation3 + $0x8] sm:$0xff] %vm296, 0.0
          %299 = vst.msk [vmem:[#allocation3 + $0x10] sm:$0xff] %vm296, 0.0
          %300 = vst.msk [vmem:[#allocation3 + $0x18] sm:$0xff] %vm296, 0.0
          %301 = vst.msk [vmem:[#allocation3 + $0x20] sm:$0xff] %vm296, 0.0
          %302 = vst.msk [vmem:[#allocation3 + $0x28] sm:$0xff] %vm296, 0.0
          %303 = vst.msk [vmem:[#allocation3 + $0x30] sm:$0xff] %vm296, 0.0
          %304 = vst.msk [vmem:[#allocation3 + $0x38] sm:$0xff] %vm296, 0.0
          %305 = vst.msk [vmem:[#allocation3 + $0x40] sm:$0xff] %vm296, 0.0
          %306 = vst.msk [vmem:[#allocation3 + $0x48] sm:$0xff] %vm296, 0.0
          %307 = vst.msk [vmem:[#allocation3 + $0x50] sm:$0xff] %vm296, 0.0
          %308 = vst.msk [vmem:[#allocation3 + $0x58] sm:$0xff] %vm296, 0.0
          %309 = vst.msk [vmem:[#allocation3 + $0x60] sm:$0xff] %vm296, 0.0
          %310 = vst.msk [vmem:[#allocation3 + $0x68] sm:$0xff] %vm296, 0.0
          %311 = vst.msk [vmem:[#allocation3 + $0x70] sm:$0xff] %vm296, 0.0
          %312 = vst.msk [vmem:[#allocation3 + $0x78] sm:$0xff] %vm296, 0.0
          %v313 = vld [vmem:[%s1] sm:$0xff]
          %v314 = vld [vmem:[%s1 + $0x8] sm:$0xff]
          %v315 = vld [vmem:[%s1 + $0x10] sm:$0xff]
          %v316 = vld [vmem:[%s1 + $0x18] sm:$0xff]
          %v317 = vld [vmem:[%s1 + $0x20] sm:$0xff]
          %v318 = vld [vmem:[%s1 + $0x28] sm:$0xff]
          %v319 = vld [vmem:[%s1 + $0x30] sm:$0xff]
          %v320 = vld [vmem:[%s1 + $0x38] sm:$0xff]
          %v321 = vld [vmem:[%s2] sm:$0x1]
          %v322 = vld [vmem:[%s3] sm:$0xff]
          %v323 = vld [vmem:[%s3 + $0x8] sm:$0xff]
          %v324 = vld [vmem:[%s4] sm:$0x1]
          %v325 = vld [vmem:[%s290] sm:$0xff]
          %v326 = vld [vmem:[%s290 + $0x8] sm:$0xff]
          %v328 = vlaneseq
          %v329 = vshrl.u32 %v328, 7
          %v330 = vsub.s32 0, %v329
          %v331 = vrot.slane %v321, %v330
          %vm333 = vcmask 261120
          %v335 = vsel %vm333, %v325, 0
          %v338 = vsel %vm333, %v326, 0
          %v341 = vsel %vm333, %v313, 0
          %v344 = vsel %vm333, %v314, 0
          %v347 = vsel %vm333, %v315, 0
          %v350 = vsel %vm333, %v316, 0
          %v353 = vsel %vm333, %v317, 0
          %v356 = vsel %vm333, %v318, 0
          %v359 = vsel %vm333, %v319, 0
          %v362 = vsel %vm333, %v320, 0
          %364 = vmatprep.subr.mxu0 0.0
          %365 = vmatpush1.xpose.msra.mxu0 0.0
          %366 = vmatprep.subr.mxu0 0.0
          %367 = vmatpush1.xpose.msra.mxu0 0.0
          %368 = vmatprep.subr.mxu0 0.0
          %369 = vmatpush1.xpose.msra.mxu0 0.0
          %370 = vmatprep.subr.mxu0 0.0
          %371 = vmatpush1.xpose.msra.mxu0 0.0
          %372 = vmatprep.subr.mxu0 0.0
          %373 = vmatpush1.xpose.msra.mxu0 0.0
          %374 = vmatprep.subr.mxu0 0.0
          %375 = vmatpush1.xpose.msra.mxu0 0.0
          %376 = vmatprep.subr.mxu0 0.0
          %377 = vmatpush1.xpose.msra.mxu0 0.0
          %378 = vmatprep.subr.mxu0 0.0
          %379 = vmatpush1.xpose.msra.mxu0 0.0
          %380 = vmatprep.subr.mxu0 0.0
          %381 = vmatpush1.xpose.msra.mxu0 %v362
          %382 = vmatprep.subr.mxu0 0.0
          %383 = vmatpush1.xpose.msra.mxu0 %v359
          %384 = vmatprep.subr.mxu0 0.0
          %385 = vmatpush1.xpose.msra.mxu0 %v356
          %386 = vmatprep.subr.mxu0 0.0
          %387 = vmatpush1.xpose.msra.mxu0 %v353
          %388 = vmatprep.subr.mxu0 0.0
          %389 = vmatpush1.xpose.msra.mxu0 %v350
          %390 = vmatprep.subr.mxu0 0.0
          %391 = vmatpush1.xpose.msra.mxu0 %v347
          %392 = vmatprep.subr.mxu0 0.0
          %393 = vmatpush1.xpose.msra.mxu0 %v344
          %394 = vmatprep.subr.mxu0 0.0
          %395 = vmatpush1.xpose.msra.mxu0 %v341
          %396 = vmatprep.subr.mxu0 0.0
          %397 = vmatpush2.xpose.msra.mxu0 0.0
          %398 = vmatprep.subr.mxu0 0.0
          %399 = vmatpush2.xpose.msra.mxu0 0.0
          %400 = vmatprep.subr.mxu0 0.0
          %401 = vmatpush2.xpose.msra.mxu0 0.0
          %402 = vmatprep.subr.mxu0 0.0
          %403 = vmatpush2.xpose.msra.mxu0 0.0
          %404 = vmatprep.subr.mxu0 0.0
          %405 = vmatpush2.xpose.msra.mxu0 0.0
          %406 = vmatprep.subr.mxu0 0.0
          %407 = vmatpush2.xpose.msra.mxu0 0.0
          %408 = vmatprep.subr.mxu0 0.0
          %409 = vmatpush2.xpose.msra.mxu0 0.0
          %410 = vmatprep.subr.mxu0 0.0
          %411 = vmatpush2.xpose.msra.mxu0 0.0
          %412 = vmatprep.subr.mxu0 0.0
          %413 = vmatpush2.xpose.msra.mxu0 0.0
          %414 = vmatprep.subr.mxu0 0.0
          %415 = vmatpush2.xpose.msra.mxu0 0.0
          %416 = vmatprep.subr.mxu0 0.0
          %417 = vmatpush2.xpose.msra.mxu0 0.0
          %418 = vmatprep.subr.mxu0 0.0
          %419 = vmatpush2.xpose.msra.mxu0 0.0
          %420 = vmatprep.subr.mxu0 0.0
          %421 = vmatpush2.xpose.msra.mxu0 0.0
          %422 = vmatprep.subr.mxu0 0.0
          %423 = vmatpush2.xpose.msra.mxu0 0.0
          %424 = vmatprep.subr.mxu0 0.0
          %425 = vmatpush2.xpose.msra.mxu0 0.0
          %426 = vmatprep.subr.mxu0 0.0
          %427 = vmatpush2.xpose.msra.mxu0 0.0
          %428 = vmatprep.mubr.f32.mxu0 0.0
          %429 = vmatmul.mubr.f32.gmra.mxu0 %v335
          %v430 = vpop.f32.mrf.mxu0
          %v431 = vadd.f32 %v331, %v430
          %v432 = vpop.f32.mrf.mxu0
          %433 = vmatprep.mubr.f32.mxu0 0.0
          %434 = vmatmul.mubr.f32.gmra.mxu0 %v338
          %v435 = vpop.f32.mrf.mxu0
          %v436 = vadd.f32 %v331, %v435
          %v437 = vpop.f32.mrf.mxu0
          %438 = vdwg.mxu0
          %vm439 = vcmp.ge.f32.partialorder %v431, 0.0
          %vm440 = vcmp.ge.f32.partialorder %v436, 0.0
          %v441 = vmul.f32 %v431, 0.1
          %v442 = vmul.f32 %v436, 0.1
          %v443 = vsel %vm439, %v431, %v441
          %v444 = vsel %vm440, %v436, %v442
          %vm445 = vcmask 523264
          %v446 = vsel %vm445, %v443, 1.0
          %v447 = vsel %vm445, %v444, 1.0
          %448 = vst.msk [vmem:[#allocation2] sm:$0xff] %vm296, %v446
          %449 = vst.msk [vmem:[#allocation2 + $0x8] sm:$0xff] %vm296, %v447
          %v451 = vlaneseq
          %v452 = vshrl.u32 %v451, 7
          %v453 = vsub.s32 0, %v452
          %v454 = vrot.slane %v324, %v453
          %vm456 = vcmask 130048
          %v458 = vsel %vm456, %v443, 0
          %v461 = vsel %vm456, %v444, 0
          %v464 = vsel %vm456, %v322, 0
          %v467 = vsel %vm456, %v323, 0
          %469 = vmatprep.subr.mxu0 0.0
          %470 = vmatpush1.xpose.msra.mxu0 0.0
          %471 = vmatprep.subr.mxu0 0.0
          %472 = vmatpush1.xpose.msra.mxu0 0.0
          %473 = vmatprep.subr.mxu0 0.0
          %474 = vmatpush1.xpose.msra.mxu0 0.0
          %475 = vmatprep.subr.mxu0 0.0
          %476 = vmatpush1.xpose.msra.mxu0 0.0
          %477 = vmatprep.subr.mxu0 0.0
          %478 = vmatpush1.xpose.msra.mxu0 0.0
          %479 = vmatprep.subr.mxu0 0.0
          %480 = vmatpush1.xpose.msra.mxu0 0.0
          %481 = vmatprep.subr.mxu0 0.0
          %482 = vmatpush1.xpose.msra.mxu0 0.0
          %483 = vmatprep.subr.mxu0 0.0
          %484 = vmatpush1.xpose.msra.mxu0 0.0
          %485 = vmatprep.subr.mxu0 0.0
          %486 = vmatpush1.xpose.msra.mxu0 0.0
          %487 = vmatprep.subr.mxu0 0.0
          %488 = vmatpush1.xpose.msra.mxu0 0.0
          %489 = vmatprep.subr.mxu0 0.0
          %490 = vmatpush1.xpose.msra.mxu0 0.0
          %491 = vmatprep.subr.mxu0 0.0
          %492 = vmatpush1.xpose.msra.mxu0 0.0
          %493 = vmatprep.subr.mxu0 0.0
          %494 = vmatpush1.xpose.msra.mxu0 0.0
          %495 = vmatprep.subr.mxu0 0.0
          %496 = vmatpush1.xpose.msra.mxu0 0.0
          %497 = vmatprep.subr.mxu0 0.0
          %498 = vmatpush1.xpose.msra.mxu0 %v467
          %499 = vmatprep.subr.mxu0 0.0
          %500 = vmatpush1.xpose.msra.mxu0 %v464
          %501 = vmatprep.subr.mxu0 0.0
          %502 = vmatpush2.xpose.msra.mxu0 0.0
          %503 = vmatprep.subr.mxu0 0.0
          %504 = vmatpush2.xpose.msra.mxu0 0.0
          %505 = vmatprep.subr.mxu0 0.0
          %506 = vmatpush2.xpose.msra.mxu0 0.0
          %507 = vmatprep.subr.mxu0 0.0
          %508 = vmatpush2.xpose.msra.mxu0 0.0
          %509 = vmatprep.subr.mxu0 0.0
          %510 = vmatpush2.xpose.msra.mxu0 0.0
          %511 = vmatprep.subr.mxu0 0.0
          %512 = vmatpush2.xpose.msra.mxu0 0.0
          %513 = vmatprep.subr.mxu0 0.0
          %514 = vmatpush2.xpose.msra.mxu0 0.0
          %515 = vmatprep.subr.mxu0 0.0
          %516 = vmatpush2.xpose.msra.mxu0 0.0
          %517 = vmatprep.subr.mxu0 0.0
          %518 = vmatpush2.xpose.msra.mxu0 0.0
          %519 = vmatprep.subr.mxu0 0.0
          %520 = vmatpush2.xpose.msra.mxu0 0.0
          %521 = vmatprep.subr.mxu0 0.0
          %522 = vmatpush2.xpose.msra.mxu0 0.0
          %523 = vmatprep.subr.mxu0 0.0
          %524 = vmatpush2.xpose.msra.mxu0 0.0
          %525 = vmatprep.subr.mxu0 0.0
          %526 = vmatpush2.xpose.msra.mxu0 0.0
          %527 = vmatprep.subr.mxu0 0.0
          %528 = vmatpush2.xpose.msra.mxu0 0.0
          %529 = vmatprep.subr.mxu0 0.0
          %530 = vmatpush2.xpose.msra.mxu0 0.0
          %531 = vmatprep.subr.mxu0 0.0
          %532 = vmatpush2.xpose.msra.mxu0 0.0
          %533 = vmatprep.mubr.f32.mxu0 0.0
          %534 = vmatmul.mubr.f32.gmra.mxu0 %v458
          %v535 = vpop.f32.mrf.mxu0
          %v536 = vadd.f32 %v454, %v535
          %v537 = vpop.f32.mrf.mxu0
          %538 = vmatprep.mubr.f32.mxu0 0.0
          %539 = vmatmul.mubr.f32.gmra.mxu0 %v461
          %v540 = vpop.f32.mrf.mxu0
          %v541 = vadd.f32 %v454, %v540
          %v542 = vpop.f32.mrf.mxu0
          %543 = vdwg.mxu0
          %546 = vrot.lane.b32.xlu0 %v536, 16
          %v547 = vpop.permute.xlu0 %546
          %548 = vrot.lane.b32.xlu0 %v541, 16
          %v549 = vpop.permute.xlu0 %548
          %vm552 = vcmask 261248
          %553 = vst.msk [vmem:[#allocation3] sm:$0xff] %vm552, %v547
          %554 = vst.msk [vmem:[#allocation3 + $0x8] sm:$0xff] %vm552, %v549
          %v555 = vld [vmem:[%s5] sm:$0xff]
          %v556 = vld [vmem:[%s5 + $0x8] sm:$0xff]
          %v557 = vld [vmem:[%s5 + $0x10] sm:$0x3]
          %v558 = vld [vmem:[%s6] sm:$0x1]
          %v560 = vlaneseq
          %v561 = vshrl.u32 %v560, 7
          %v562 = vsub.s32 0, %v561
          %v563 = vrot.slane %v558, %v562
          %565 = vrot.lane.b32.xlu0 %v443, 96
          %v566 = vpop.permute.xlu0 %565
          %567 = vrot.lane.b32.xlu0 %v444, 96
          %v568 = vpop.permute.xlu0 %567
          %v569 = vsel %vm456, %v566, 0
          %v571 = vsel %vm456, %v568, 0
          %v574 = vsel %vm456, %v555, 0
          %v577 = vsel %vm456, %v556, 0
          %v580 = vsel %vm456, %v557, 0
          %582 = vmatprep.subr.mxu0 0.0
          %583 = vmatpush1.xpose.msra.mxu0 0.0
          %584 = vmatprep.subr.mxu0 0.0
          %585 = vmatpush1.xpose.msra.mxu0 0.0
          %586 = vmatprep.subr.mxu0 0.0
          %587 = vmatpush1.xpose.msra.mxu0 0.0
          %588 = vmatprep.subr.mxu0 0.0
          %589 = vmatpush1.xpose.msra.mxu0 0.0
          %590 = vmatprep.subr.mxu0 0.0
          %591 = vmatpush1.xpose.msra.mxu0 0.0
          %592 = vmatprep.subr.mxu0 0.0
          %593 = vmatpush1.xpose.msra.mxu0 0.0
          %594 = vmatprep.subr.mxu0 0.0
          %595 = vmatpush1.xpose.msra.mxu0 0.0
          %596 = vmatprep.subr.mxu0 0.0
          %597 = vmatpush1.xpose.msra.mxu0 0.0
          %598 = vmatprep.subr.mxu0 0.0
          %599 = vmatpush1.xpose.msra.mxu0 0.0
          %600 = vmatprep.subr.mxu0 0.0
          %601 = vmatpush1.xpose.msra.mxu0 0.0
          %602 = vmatprep.subr.mxu0 0.0
          %603 = vmatpush1.xpose.msra.mxu0 0.0
          %604 = vmatprep.subr.mxu0 0.0
          %605 = vmatpush1.xpose.msra.mxu0 0.0
          %606 = vmatprep.subr.mxu0 0.0
          %607 = vmatpush1.xpose.msra.mxu0 0.0
          %608 = vmatprep.subr.mxu0 0.0
          %609 = vmatpush1.xpose.msra.mxu0 %v580
          %610 = vmatprep.subr.mxu0 0.0
          %611 = vmatpush1.xpose.msra.mxu0 %v577
          %612 = vmatprep.subr.mxu0 0.0
          %613 = vmatpush1.xpose.msra.mxu0 %v574
          %614 = vmatprep.subr.mxu0 0.0
          %615 = vmatpush2.xpose.msra.mxu0 0.0
          %616 = vmatprep.subr.mxu0 0.0
          %617 = vmatpush2.xpose.msra.mxu0 0.0
          %618 = vmatprep.subr.mxu0 0.0
          %619 = vmatpush2.xpose.msra.mxu0 0.0
          %620 = vmatprep.subr.mxu0 0.0
          %621 = vmatpush2.xpose.msra.mxu0 0.0
          %622 = vmatprep.subr.mxu0 0.0
          %623 = vmatpush2.xpose.msra.mxu0 0.0
          %624 = vmatprep.subr.mxu0 0.0
          %625 = vmatpush2.xpose.msra.mxu0 0.0
          %626 = vmatprep.subr.mxu0 0.0
          %627 = vmatpush2.xpose.msra.mxu0 0.0
          %628 = vmatprep.subr.mxu0 0.0
          %629 = vmatpush2.xpose.msra.mxu0 0.0
          %630 = vmatprep.subr.mxu0 0.0
          %631 = vmatpush2.xpose.msra.mxu0 0.0
          %632 = vmatprep.subr.mxu0 0.0
          %633 = vmatpush2.xpose.msra.mxu0 0.0
          %634 = vmatprep.subr.mxu0 0.0
          %635 = vmatpush2.xpose.msra.mxu0 0.0
          %636 = vmatprep.subr.mxu0 0.0
          %637 = vmatpush2.xpose.msra.mxu0 0.0
          %638 = vmatprep.subr.mxu0 0.0
          %639 = vmatpush2.xpose.msra.mxu0 0.0
          %640 = vmatprep.subr.mxu0 0.0
          %641 = vmatpush2.xpose.msra.mxu0 0.0
          %642 = vmatprep.subr.mxu0 0.0
          %643 = vmatpush2.xpose.msra.mxu0 0.0
          %644 = vmatprep.subr.mxu0 0.0
          %645 = vmatpush2.xpose.msra.mxu0 0.0
          %646 = vmatprep.mubr.f32.mxu0 0.0
          %647 = vmatmul.mubr.f32.gmra.mxu0 %v569
          %v648 = vpop.f32.mrf.mxu0
          %v649 = vadd.f32 %v563, %v648
          %v650 = vpop.f32.mrf.mxu0
          %651 = vmatprep.mubr.f32.mxu0 0.0
          %652 = vmatmul.mubr.f32.gmra.mxu0 %v571
          %v653 = vpop.f32.mrf.mxu0
          %v654 = vadd.f32 %v563, %v653
          %v655 = vpop.f32.mrf.mxu0
          %656 = vdwg.mxu0
          %659 = vrot.lane.b32.xlu0 %v649, 48
          %v660 = vpop.permute.xlu0 %659
          %661 = vrot.lane.b32.xlu0 %v654, 48
          %v662 = vpop.permute.xlu0 %661
          %vm665 = vcmask 523648
          %666 = vst.msk [vmem:[#allocation3 + $0x10] sm:$0xff] %vm665, %v660
          %667 = vst.msk [vmem:[#allocation3 + $0x18] sm:$0xff] %vm665, %v662
          %668 = vrot.lane.b32.xlu0 %v649, 127
          %v669 = vpop.permute.xlu0 %668
          %670 = vrot.lane.b32.xlu0 %v654, 127
          %v671 = vpop.permute.xlu0 %670
          %v674 = vadd.f32 %v649, %v669
          %v675 = vadd.f32 %v654, %v671
          %678 = vrot.lane.b32.xlu0 %v674, 48
          %v679 = vpop.permute.xlu0 %678
          %680 = vrot.lane.b32.xlu0 %v675, 48
          %v681 = vpop.permute.xlu0 %680
          %vm684 = vcmask 531968
          %685 = vst.msk [vmem:[#allocation3 + $0x10] sm:$0xff] %vm684, %v679
          %686 = vst.msk [vmem:[#allocation3 + $0x18] sm:$0xff] %vm684, %v681
          %s687 = scalar_lea.vmem %s5, 24
          %v688 = vld [vmem:[%s687] sm:$0xff]
          %v689 = vld [vmem:[%s687 + $0x8] sm:$0xff]
          %v690 = vld [vmem:[%s687 + $0x10] sm:$0x3]
          %s691 = scalar_lea.vmem %s6, 1
          %v692 = vld [vmem:[%s691] sm:$0x1]
          %v694 = vlaneseq
          %v695 = vshrl.u32 %v694, 7
          %v696 = vsub.s32 0, %v695
          %v697 = vrot.slane %v692, %v696
          %v700 = vsel %vm456, %v688, 0
          %v703 = vsel %vm456, %v689, 0
          %v706 = vsel %vm456, %v690, 0
          %708 = vmatprep.subr.mxu0 0.0
          %709 = vmatpush1.xpose.msra.mxu0 0.0
          %710 = vmatprep.subr.mxu0 0.0
          %711 = vmatpush1.xpose.msra.mxu0 0.0
          %712 = vmatprep.subr.mxu0 0.0
          %713 = vmatpush1.xpose.msra.mxu0 0.0
          %714 = vmatprep.subr.mxu0 0.0
          %715 = vmatpush1.xpose.msra.mxu0 0.0
          %716 = vmatprep.subr.mxu0 0.0
          %717 = vmatpush1.xpose.msra.mxu0 0.0
          %718 = vmatprep.subr.mxu0 0.0
          %719 = vmatpush1.xpose.msra.mxu0 0.0
          %720 = vmatprep.subr.mxu0 0.0
          %721 = vmatpush1.xpose.msra.mxu0 0.0
          %722 = vmatprep.subr.mxu0 0.0
          %723 = vmatpush1.xpose.msra.mxu0 0.0
          %724 = vmatprep.subr.mxu0 0.0
          %725 = vmatpush1.xpose.msra.mxu0 0.0
          %726 = vmatprep.subr.mxu0 0.0
          %727 = vmatpush1.xpose.msra.mxu0 0.0
          %728 = vmatprep.subr.mxu0 0.0
          %729 = vmatpush1.xpose.msra.mxu0 0.0
          %730 = vmatprep.subr.mxu0 0.0
          %731 = vmatpush1.xpose.msra.mxu0 0.0
          %732 = vmatprep.subr.mxu0 0.0
          %733 = vmatpush1.xpose.msra.mxu0 0.0
          %734 = vmatprep.subr.mxu0 0.0
          %735 = vmatpush1.xpose.msra.mxu0 %v706
          %736 = vmatprep.subr.mxu0 0.0
          %737 = vmatpush1.xpose.msra.mxu0 %v703
          %738 = vmatprep.subr.mxu0 0.0
          %739 = vmatpush1.xpose.msra.mxu0 %v700
          %740 = vmatprep.subr.mxu0 0.0
          %741 = vmatpush2.xpose.msra.mxu0 0.0
          %742 = vmatprep.subr.mxu0 0.0
          %743 = vmatpush2.xpose.msra.mxu0 0.0
          %744 = vmatprep.subr.mxu0 0.0
          %745 = vmatpush2.xpose.msra.mxu0 0.0
          %746 = vmatprep.subr.mxu0 0.0
          %747 = vmatpush2.xpose.msra.mxu0 0.0
          %748 = vmatprep.subr.mxu0 0.0
          %749 = vmatpush2.xpose.msra.mxu0 0.0
          %750 = vmatprep.subr.mxu0 0.0
          %751 = vmatpush2.xpose.msra.mxu0 0.0
          %752 = vmatprep.subr.mxu0 0.0
          %753 = vmatpush2.xpose.msra.mxu0 0.0
          %754 = vmatprep.subr.mxu0 0.0
          %755 = vmatpush2.xpose.msra.mxu0 0.0
          %756 = vmatprep.subr.mxu0 0.0
          %757 = vmatpush2.xpose.msra.mxu0 0.0
          %758 = vmatprep.subr.mxu0 0.0
          %759 = vmatpush2.xpose.msra.mxu0 0.0
          %760 = vmatprep.subr.mxu0 0.0
          %761 = vmatpush2.xpose.msra.mxu0 0.0
          %762 = vmatprep.subr.mxu0 0.0
          %763 = vmatpush2.xpose.msra.mxu0 0.0
          %764 = vmatprep.subr.mxu0 0.0
          %765 = vmatpush2.xpose.msra.mxu0 0.0
          %766 = vmatprep.subr.mxu0 0.0
          %767 = vmatpush2.xpose.msra.mxu0 0.0
          %768 = vmatprep.subr.mxu0 0.0
          %769 = vmatpush2.xpose.msra.mxu0 0.0
          %770 = vmatprep.subr.mxu0 0.0
          %771 = vmatpush2.xpose.msra.mxu0 0.0
          %772 = vmatprep.mubr.f32.mxu0 0.0
          %773 = vmatmul.mubr.f32.gmra.mxu0 %v569
          %v774 = vpop.f32.mrf.mxu0
          %v775 = vadd.f32 %v697, %v774
          %v776 = vpop.f32.mrf.mxu0
          %777 = vmatprep.mubr.f32.mxu0 0.0
          %778 = vmatmul.mubr.f32.gmra.mxu0 %v571
          %v779 = vpop.f32.mrf.mxu0
          %v780 = vadd.f32 %v697, %v779
          %v781 = vpop.f32.mrf.mxu0
          %782 = vdwg.mxu0
          %785 = vrot.lane.b32.xlu0 %v775, 48
          %v786 = vpop.permute.xlu0 %785
          %787 = vrot.lane.b32.xlu0 %v780, 48
          %v788 = vpop.permute.xlu0 %787
          %791 = vst.msk [vmem:[#allocation3 + $0x20] sm:$0xff] %vm665, %v786
          %792 = vst.msk [vmem:[#allocation3 + $0x28] sm:$0xff] %vm665, %v788
          %793 = vrot.lane.b32.xlu0 %v775, 127
          %v794 = vpop.permute.xlu0 %793
          %795 = vrot.lane.b32.xlu0 %v780, 127
          %v796 = vpop.permute.xlu0 %795
          %v799 = vadd.f32 %v775, %v794
          %v800 = vadd.f32 %v780, %v796
          %803 = vrot.lane.b32.xlu0 %v799, 48
          %v804 = vpop.permute.xlu0 %803
          %805 = vrot.lane.b32.xlu0 %v800, 48
          %v806 = vpop.permute.xlu0 %805
          %809 = vst.msk [vmem:[#allocation3 + $0x20] sm:$0xff] %vm684, %v804
          %810 = vst.msk [vmem:[#allocation3 + $0x28] sm:$0xff] %vm684, %v806
          %s811 = scalar_lea.vmem %s5, 48
          %v812 = vld [vmem:[%s811] sm:$0xff]
          %v813 = vld [vmem:[%s811 + $0x8] sm:$0xff]
          %v814 = vld [vmem:[%s811 + $0x10] sm:$0x3]
          %s815 = scalar_lea.vmem %s6, 2
          %v816 = vld [vmem:[%s815] sm:$0x1]
          %v818 = vlaneseq
          %v819 = vshrl.u32 %v818, 7
          %v820 = vsub.s32 0, %v819
          %v821 = vrot.slane %v816, %v820
          %v824 = vsel %vm456, %v812, 0
          %v827 = vsel %vm456, %v813, 0
          %v830 = vsel %vm456, %v814, 0
          %832 = vmatprep.subr.mxu0 0.0
          %833 = vmatpush1.xpose.msra.mxu0 0.0
          %834 = vmatprep.subr.mxu0 0.0
          %835 = vmatpush1.xpose.msra.mxu0 0.0
          %836 = vmatprep.subr.mxu0 0.0
          %837 = vmatpush1.xpose.msra.mxu0 0.0
          %838 = vmatprep.subr.mxu0 0.0
          %839 = vmatpush1.xpose.msra.mxu0 0.0
          %840 = vmatprep.subr.mxu0 0.0
          %841 = vmatpush1.xpose.msra.mxu0 0.0
          %842 = vmatprep.subr.mxu0 0.0
          %843 = vmatpush1.xpose.msra.mxu0 0.0
          %844 = vmatprep.subr.mxu0 0.0
          %845 = vmatpush1.xpose.msra.mxu0 0.0
          %846 = vmatprep.subr.mxu0 0.0
          %847 = vmatpush1.xpose.msra.mxu0 0.0
          %848 = vmatprep.subr.mxu0 0.0
          %849 = vmatpush1.xpose.msra.mxu0 0.0
          %850 = vmatprep.subr.mxu0 0.0
          %851 = vmatpush1.xpose.msra.mxu0 0.0
          %852 = vmatprep.subr.mxu0 0.0
          %853 = vmatpush1.xpose.msra.mxu0 0.0
          %854 = vmatprep.subr.mxu0 0.0
          %855 = vmatpush1.xpose.msra.mxu0 0.0
          %856 = vmatprep.subr.mxu0 0.0
          %857 = vmatpush1.xpose.msra.mxu0 0.0
          %858 = vmatprep.subr.mxu0 0.0
          %859 = vmatpush1.xpose.msra.mxu0 %v830
          %860 = vmatprep.subr.mxu0 0.0
          %861 = vmatpush1.xpose.msra.mxu0 %v827
          %862 = vmatprep.subr.mxu0 0.0
          %863 = vmatpush1.xpose.msra.mxu0 %v824
          %864 = vmatprep.subr.mxu0 0.0
          %865 = vmatpush2.xpose.msra.mxu0 0.0
          %866 = vmatprep.subr.mxu0 0.0
          %867 = vmatpush2.xpose.msra.mxu0 0.0
          %868 = vmatprep.subr.mxu0 0.0
          %869 = vmatpush2.xpose.msra.mxu0 0.0
          %870 = vmatprep.subr.mxu0 0.0
          %871 = vmatpush2.xpose.msra.mxu0 0.0
          %872 = vmatprep.subr.mxu0 0.0
          %873 = vmatpush2.xpose.msra.mxu0 0.0
          %874 = vmatprep.subr.mxu0 0.0
          %875 = vmatpush2.xpose.msra.mxu0 0.0
          %876 = vmatprep.subr.mxu0 0.0
          %877 = vmatpush2.xpose.msra.mxu0 0.0
          %878 = vmatprep.subr.mxu0 0.0
          %879 = vmatpush2.xpose.msra.mxu0 0.0
          %880 = vmatprep.subr.mxu0 0.0
          %881 = vmatpush2.xpose.msra.mxu0 0.0
          %882 = vmatprep.subr.mxu0 0.0
          %883 = vmatpush2.xpose.msra.mxu0 0.0
          %884 = vmatprep.subr.mxu0 0.0
          %885 = vmatpush2.xpose.msra.mxu0 0.0
          %886 = vmatprep.subr.mxu0 0.0
          %887 = vmatpush2.xpose.msra.mxu0 0.0
          %888 = vmatprep.subr.mxu0 0.0
          %889 = vmatpush2.xpose.msra.mxu0 0.0
          %890 = vmatprep.subr.mxu0 0.0
          %891 = vmatpush2.xpose.msra.mxu0 0.0
          %892 = vmatprep.subr.mxu0 0.0
          %893 = vmatpush2.xpose.msra.mxu0 0.0
          %894 = vmatprep.subr.mxu0 0.0
          %895 = vmatpush2.xpose.msra.mxu0 0.0
          %896 = vmatprep.mubr.f32.mxu0 0.0
          %897 = vmatmul.mubr.f32.gmra.mxu0 %v569
          %v898 = vpop.f32.mrf.mxu0
          %v899 = vadd.f32 %v821, %v898
          %v900 = vpop.f32.mrf.mxu0
          %901 = vmatprep.mubr.f32.mxu0 0.0
          %902 = vmatmul.mubr.f32.gmra.mxu0 %v571
          %v903 = vpop.f32.mrf.mxu0
          %v904 = vadd.f32 %v821, %v903
          %v905 = vpop.f32.mrf.mxu0
          %906 = vdwg.mxu0
          %909 = vrot.lane.b32.xlu0 %v899, 48
          %v910 = vpop.permute.xlu0 %909
          %911 = vrot.lane.b32.xlu0 %v904, 48
          %v912 = vpop.permute.xlu0 %911
          %915 = vst.msk [vmem:[#allocation3 + $0x30] sm:$0xff] %vm665, %v910
          %916 = vst.msk [vmem:[#allocation3 + $0x38] sm:$0xff] %vm665, %v912
          %917 = vrot.lane.b32.xlu0 %v899, 127
          %v918 = vpop.permute.xlu0 %917
          %919 = vrot.lane.b32.xlu0 %v904, 127
          %v920 = vpop.permute.xlu0 %919
          %v923 = vadd.f32 %v899, %v918
          %v924 = vadd.f32 %v904, %v920
          %927 = vrot.lane.b32.xlu0 %v923, 48
          %v928 = vpop.permute.xlu0 %927
          %929 = vrot.lane.b32.xlu0 %v924, 48
          %v930 = vpop.permute.xlu0 %929
          %933 = vst.msk [vmem:[#allocation3 + $0x30] sm:$0xff] %vm684, %v928
          %934 = vst.msk [vmem:[#allocation3 + $0x38] sm:$0xff] %vm684, %v930
          %s935 = scalar_lea.vmem %s5, 72
          %v936 = vld [vmem:[%s935] sm:$0xff]
          %v937 = vld [vmem:[%s935 + $0x8] sm:$0xff]
          %v938 = vld [vmem:[%s935 + $0x10] sm:$0x3]
          %s939 = scalar_lea.vmem %s6, 3
          %v940 = vld [vmem:[%s939] sm:$0x1]
          %v942 = vlaneseq
          %v943 = vshrl.u32 %v942, 7
          %v944 = vsub.s32 0, %v943
          %v945 = vrot.slane %v940, %v944
          %v948 = vsel %vm456, %v936, 0
          %v951 = vsel %vm456, %v937, 0
          %v954 = vsel %vm456, %v938, 0
          %956 = vmatprep.subr.mxu0 0.0
          %957 = vmatpush1.xpose.msra.mxu0 0.0
          %958 = vmatprep.subr.mxu0 0.0
          %959 = vmatpush1.xpose.msra.mxu0 0.0
          %960 = vmatprep.subr.mxu0 0.0
          %961 = vmatpush1.xpose.msra.mxu0 0.0
          %962 = vmatprep.subr.mxu0 0.0
          %963 = vmatpush1.xpose.msra.mxu0 0.0
          %964 = vmatprep.subr.mxu0 0.0
          %965 = vmatpush1.xpose.msra.mxu0 0.0
          %966 = vmatprep.subr.mxu0 0.0
          %967 = vmatpush1.xpose.msra.mxu0 0.0
          %968 = vmatprep.subr.mxu0 0.0
          %969 = vmatpush1.xpose.msra.mxu0 0.0
          %970 = vmatprep.subr.mxu0 0.0
          %971 = vmatpush1.xpose.msra.mxu0 0.0
          %972 = vmatprep.subr.mxu0 0.0
          %973 = vmatpush1.xpose.msra.mxu0 0.0
          %974 = vmatprep.subr.mxu0 0.0
          %975 = vmatpush1.xpose.msra.mxu0 0.0
          %976 = vmatprep.subr.mxu0 0.0
          %977 = vmatpush1.xpose.msra.mxu0 0.0
          %978 = vmatprep.subr.mxu0 0.0
          %979 = vmatpush1.xpose.msra.mxu0 0.0
          %980 = vmatprep.subr.mxu0 0.0
          %981 = vmatpush1.xpose.msra.mxu0 0.0
          %982 = vmatprep.subr.mxu0 0.0
          %983 = vmatpush1.xpose.msra.mxu0 %v954
          %984 = vmatprep.subr.mxu0 0.0
          %985 = vmatpush1.xpose.msra.mxu0 %v951
          %986 = vmatprep.subr.mxu0 0.0
          %987 = vmatpush1.xpose.msra.mxu0 %v948
          %988 = vmatprep.subr.mxu0 0.0
          %989 = vmatpush2.xpose.msra.mxu0 0.0
          %990 = vmatprep.subr.mxu0 0.0
          %991 = vmatpush2.xpose.msra.mxu0 0.0
          %992 = vmatprep.subr.mxu0 0.0
          %993 = vmatpush2.xpose.msra.mxu0 0.0
          %994 = vmatprep.subr.mxu0 0.0
          %995 = vmatpush2.xpose.msra.mxu0 0.0
          %996 = vmatprep.subr.mxu0 0.0
          %997 = vmatpush2.xpose.msra.mxu0 0.0
          %998 = vmatprep.subr.mxu0 0.0
          %999 = vmatpush2.xpose.msra.mxu0 0.0
          %1000 = vmatprep.subr.mxu0 0.0
          %1001 = vmatpush2.xpose.msra.mxu0 0.0
          %1002 = vmatprep.subr.mxu0 0.0
          %1003 = vmatpush2.xpose.msra.mxu0 0.0
          %1004 = vmatprep.subr.mxu0 0.0
          %1005 = vmatpush2.xpose.msra.mxu0 0.0
          %1006 = vmatprep.subr.mxu0 0.0
          %1007 = vmatpush2.xpose.msra.mxu0 0.0
          %1008 = vmatprep.subr.mxu0 0.0
          %1009 = vmatpush2.xpose.msra.mxu0 0.0
          %1010 = vmatprep.subr.mxu0 0.0
          %1011 = vmatpush2.xpose.msra.mxu0 0.0
          %1012 = vmatprep.subr.mxu0 0.0
          %1013 = vmatpush2.xpose.msra.mxu0 0.0
          %1014 = vmatprep.subr.mxu0 0.0
          %1015 = vmatpush2.xpose.msra.mxu0 0.0
          %1016 = vmatprep.subr.mxu0 0.0
          %1017 = vmatpush2.xpose.msra.mxu0 0.0
          %1018 = vmatprep.subr.mxu0 0.0
          %1019 = vmatpush2.xpose.msra.mxu0 0.0
          %1020 = vmatprep.mubr.f32.mxu0 0.0
          %1021 = vmatmul.mubr.f32.gmra.mxu0 %v569
          %v1022 = vpop.f32.mrf.mxu0
          %v1023 = vadd.f32 %v945, %v1022
          %v1024 = vpop.f32.mrf.mxu0
          %1025 = vmatprep.mubr.f32.mxu0 0.0
          %1026 = vmatmul.mubr.f32.gmra.mxu0 %v571
          %v1027 = vpop.f32.mrf.mxu0
          %v1028 = vadd.f32 %v945, %v1027
          %v1029 = vpop.f32.mrf.mxu0
          %1030 = vdwg.mxu0
          %1033 = vrot.lane.b32.xlu0 %v1023, 48
          %v1034 = vpop.permute.xlu0 %1033
          %1035 = vrot.lane.b32.xlu0 %v1028, 48
          %v1036 = vpop.permute.xlu0 %1035
          %1039 = vst.msk [vmem:[#allocation3 + $0x40] sm:$0xff] %vm665, %v1034
          %1040 = vst.msk [vmem:[#allocation3 + $0x48] sm:$0xff] %vm665, %v1036
          %1041 = vrot.lane.b32.xlu0 %v1023, 127
          %v1042 = vpop.permute.xlu0 %1041
          %1043 = vrot.lane.b32.xlu0 %v1028, 127
          %v1044 = vpop.permute.xlu0 %1043
          %v1047 = vadd.f32 %v1023, %v1042
          %v1048 = vadd.f32 %v1028, %v1044
          %1051 = vrot.lane.b32.xlu0 %v1047, 48
          %v1052 = vpop.permute.xlu0 %1051
          %1053 = vrot.lane.b32.xlu0 %v1048, 48
          %v1054 = vpop.permute.xlu0 %1053
          %1057 = vst.msk [vmem:[#allocation3 + $0x40] sm:$0xff] %vm684, %v1052
          %1058 = vst.msk [vmem:[#allocation3 + $0x48] sm:$0xff] %vm684, %v1054
          %s1059 = scalar_lea.vmem %s5, 96
          %v1060 = vld [vmem:[%s1059] sm:$0xff]
          %v1061 = vld [vmem:[%s1059 + $0x8] sm:$0xff]
          %v1062 = vld [vmem:[%s1059 + $0x10] sm:$0x3]
          %s1063 = scalar_lea.vmem %s6, 4
          %v1064 = vld [vmem:[%s1063] sm:$0x1]
          %v1066 = vlaneseq
          %v1067 = vshrl.u32 %v1066, 7
          %v1068 = vsub.s32 0, %v1067
          %v1069 = vrot.slane %v1064, %v1068
          %v1072 = vsel %vm456, %v1060, 0
          %v1075 = vsel %vm456, %v1061, 0
          %v1078 = vsel %vm456, %v1062, 0
          %1080 = vmatprep.subr.mxu0 0.0
          %1081 = vmatpush1.xpose.msra.mxu0 0.0
          %1082 = vmatprep.subr.mxu0 0.0
          %1083 = vmatpush1.xpose.msra.mxu0 0.0
          %1084 = vmatprep.subr.mxu0 0.0
          %1085 = vmatpush1.xpose.msra.mxu0 0.0
          %1086 = vmatprep.subr.mxu0 0.0
          %1087 = vmatpush1.xpose.msra.mxu0 0.0
          %1088 = vmatprep.subr.mxu0 0.0
          %1089 = vmatpush1.xpose.msra.mxu0 0.0
          %1090 = vmatprep.subr.mxu0 0.0
          %1091 = vmatpush1.xpose.msra.mxu0 0.0
          %1092 = vmatprep.subr.mxu0 0.0
          %1093 = vmatpush1.xpose.msra.mxu0 0.0
          %1094 = vmatprep.subr.mxu0 0.0
          %1095 = vmatpush1.xpose.msra.mxu0 0.0
          %1096 = vmatprep.subr.mxu0 0.0
          %1097 = vmatpush1.xpose.msra.mxu0 0.0
          %1098 = vmatprep.subr.mxu0 0.0
          %1099 = vmatpush1.xpose.msra.mxu0 0.0
          %1100 = vmatprep.subr.mxu0 0.0
          %1101 = vmatpush1.xpose.msra.mxu0 0.0
          %1102 = vmatprep.subr.mxu0 0.0
          %1103 = vmatpush1.xpose.msra.mxu0 0.0
          %1104 = vmatprep.subr.mxu0 0.0
          %1105 = vmatpush1.xpose.msra.mxu0 0.0
          %1106 = vmatprep.subr.mxu0 0.0
          %1107 = vmatpush1.xpose.msra.mxu0 %v1078
          %1108 = vmatprep.subr.mxu0 0.0
          %1109 = vmatpush1.xpose.msra.mxu0 %v1075
          %1110 = vmatprep.subr.mxu0 0.0
          %1111 = vmatpush1.xpose.msra.mxu0 %v1072
          %1112 = vmatprep.subr.mxu0 0.0
          %1113 = vmatpush2.xpose.msra.mxu0 0.0
          %1114 = vmatprep.subr.mxu0 0.0
          %1115 = vmatpush2.xpose.msra.mxu0 0.0
          %1116 = vmatprep.subr.mxu0 0.0
          %1117 = vmatpush2.xpose.msra.mxu0 0.0
          %1118 = vmatprep.subr.mxu0 0.0
          %1119 = vmatpush2.xpose.msra.mxu0 0.0
          %1120 = vmatprep.subr.mxu0 0.0
          %1121 = vmatpush2.xpose.msra.mxu0 0.0
          %1122 = vmatprep.subr.mxu0 0.0
          %1123 = vmatpush2.xpose.msra.mxu0 0.0
          %1124 = vmatprep.subr.mxu0 0.0
          %1125 = vmatpush2.xpose.msra.mxu0 0.0
          %1126 = vmatprep.subr.mxu0 0.0
          %1127 = vmatpush2.xpose.msra.mxu0 0.0
          %1128 = vmatprep.subr.mxu0 0.0
          %1129 = vmatpush2.xpose.msra.mxu0 0.0
          %1130 = vmatprep.subr.mxu0 0.0
          %1131 = vmatpush2.xpose.msra.mxu0 0.0
          %1132 = vmatprep.subr.mxu0 0.0
          %1133 = vmatpush2.xpose.msra.mxu0 0.0
          %1134 = vmatprep.subr.mxu0 0.0
          %1135 = vmatpush2.xpose.msra.mxu0 0.0
          %1136 = vmatprep.subr.mxu0 0.0
          %1137 = vmatpush2.xpose.msra.mxu0 0.0
          %1138 = vmatprep.subr.mxu0 0.0
          %1139 = vmatpush2.xpose.msra.mxu0 0.0
          %1140 = vmatprep.subr.mxu0 0.0
          %1141 = vmatpush2.xpose.msra.mxu0 0.0
          %1142 = vmatprep.subr.mxu0 0.0
          %1143 = vmatpush2.xpose.msra.mxu0 0.0
          %1144 = vmatprep.mubr.f32.mxu0 0.0
          %1145 = vmatmul.mubr.f32.gmra.mxu0 %v569
          %v1146 = vpop.f32.mrf.mxu0
          %v1147 = vadd.f32 %v1069, %v1146
          %v1148 = vpop.f32.mrf.mxu0
          %1149 = vmatprep.mubr.f32.mxu0 0.0
          %1150 = vmatmul.mubr.f32.gmra.mxu0 %v571
          %v1151 = vpop.f32.mrf.mxu0
          %v1152 = vadd.f32 %v1069, %v1151
          %v1153 = vpop.f32.mrf.mxu0
          %1154 = vdwg.mxu0
          %1157 = vrot.lane.b32.xlu0 %v1147, 48
          %v1158 = vpop.permute.xlu0 %1157
          %1159 = vrot.lane.b32.xlu0 %v1152, 48
          %v1160 = vpop.permute.xlu0 %1159
          %1163 = vst.msk [vmem:[#allocation3 + $0x50] sm:$0xff] %vm665, %v1158
          %1164 = vst.msk [vmem:[#allocation3 + $0x58] sm:$0xff] %vm665, %v1160
          %1165 = vrot.lane.b32.xlu0 %v1147, 127
          %v1166 = vpop.permute.xlu0 %1165
          %1167 = vrot.lane.b32.xlu0 %v1152, 127
          %v1168 = vpop.permute.xlu0 %1167
          %v1171 = vadd.f32 %v1147, %v1166
          %v1172 = vadd.f32 %v1152, %v1168
          %1175 = vrot.lane.b32.xlu0 %v1171, 48
          %v1176 = vpop.permute.xlu0 %1175
          %1177 = vrot.lane.b32.xlu0 %v1172, 48
          %v1178 = vpop.permute.xlu0 %1177
          %1181 = vst.msk [vmem:[#allocation3 + $0x50] sm:$0xff] %vm684, %v1176
          %1182 = vst.msk [vmem:[#allocation3 + $0x58] sm:$0xff] %vm684, %v1178
        $region52: #{tpu_custom_call.1} parent=47 // pred_fallthru
          _
        %s1183 = smul.u32 %s26, 16
        %s1184 = scalar_lea.vmem [#allocation2], %s1183
        %v1185 = vld [vmem:[%s1184] sm:$0xff]
        %v1186 = vld [vmem:[%s1184 + $0x8] sm:$0xff]
        %v1187 = vld [vmem:[#allocation3] sm:$0xff]
        %v1188 = vld [vmem:[#allocation3 + $0x8] sm:$0xff]
        %v1189 = vld [vmem:[#allocation3 + $0x10] sm:$0xff]
        %v1190 = vld [vmem:[#allocation3 + $0x18] sm:$0xff]
        %v1191 = vld [vmem:[#allocation3 + $0x20] sm:$0xff]
        %v1192 = vld [vmem:[#allocation3 + $0x28] sm:$0xff]
        %v1193 = vld [vmem:[#allocation3 + $0x30] sm:$0xff]
        %v1194 = vld [vmem:[#allocation3 + $0x38] sm:$0xff]
        %v1195 = vld [vmem:[#allocation3 + $0x40] sm:$0xff]
        %v1196 = vld [vmem:[#allocation3 + $0x48] sm:$0xff]
        %v1197 = vld [vmem:[#allocation3 + $0x50] sm:$0xff]
        %v1198 = vld [vmem:[#allocation3 + $0x58] sm:$0xff]
        %v1199 = vld [vmem:[#allocation3 + $0x60] sm:$0xff]
        %v1200 = vld [vmem:[#allocation3 + $0x68] sm:$0xff]
        %v1201 = vld [vmem:[#allocation3 + $0x70] sm:$0xff]
        %v1202 = vld [vmem:[#allocation3 + $0x78] sm:$0xff]
        %vm1203 = vcmask 531456
        %v1205 = vsel %vm1203, %v1185, 0
        %v1208 = vsel %vm1203, %v1186, 0
        %v1211 = vsel %vm1203, %v1187, 0
        %v1214 = vsel %vm1203, %v1188, 0
        %v1217 = vsel %vm1203, %v1189, 0
        %v1220 = vsel %vm1203, %v1190, 0
        %v1223 = vsel %vm1203, %v1191, 0
        %v1226 = vsel %vm1203, %v1192, 0
        %v1229 = vsel %vm1203, %v1193, 0
        %v1232 = vsel %vm1203, %v1194, 0
        %v1235 = vsel %vm1203, %v1195, 0
        %v1238 = vsel %vm1203, %v1196, 0
        %v1241 = vsel %vm1203, %v1197, 0
        %v1244 = vsel %vm1203, %v1198, 0
        %v1247 = vsel %vm1203, %v1199, 0
        %v1250 = vsel %vm1203, %v1200, 0
        %v1253 = vsel %vm1203, %v1201, 0
        %v1256 = vsel %vm1203, %v1202, 0
        %1258 = vmatprep.subr.mxu0 0.0
        %1259 = vmatpush1.xpose.msra.mxu0 %v1256
        %1260 = vmatprep.subr.mxu0 0.0
        %1261 = vmatpush1.xpose.msra.mxu0 %v1253
        %1262 = vmatprep.subr.mxu0 0.0
        %1263 = vmatpush1.xpose.msra.mxu0 %v1250
        %1264 = vmatprep.subr.mxu0 0.0
        %1265 = vmatpush1.xpose.msra.mxu0 %v1247
        %1266 = vmatprep.subr.mxu0 0.0
        %1267 = vmatpush1.xpose.msra.mxu0 %v1244
        %1268 = vmatprep.subr.mxu0 0.0
        %1269 = vmatpush1.xpose.msra.mxu0 %v1241
        %1270 = vmatprep.subr.mxu0 0.0
        %1271 = vmatpush1.xpose.msra.mxu0 %v1238
        %1272 = vmatprep.subr.mxu0 0.0
        %1273 = vmatpush1.xpose.msra.mxu0 %v1235
        %1274 = vmatprep.subr.mxu0 0.0
        %1275 = vmatpush1.xpose.msra.mxu0 %v1232
        %1276 = vmatprep.subr.mxu0 0.0
        %1277 = vmatpush1.xpose.msra.mxu0 %v1229
        %1278 = vmatprep.subr.mxu0 0.0
        %1279 = vmatpush1.xpose.msra.mxu0 %v1226
        %1280 = vmatprep.subr.mxu0 0.0
        %1281 = vmatpush1.xpose.msra.mxu0 %v1223
        %1282 = vmatprep.subr.mxu0 0.0
        %1283 = vmatpush1.xpose.msra.mxu0 %v1220
        %1284 = vmatprep.subr.mxu0 0.0
        %1285 = vmatpush1.xpose.msra.mxu0 %v1217
        %1286 = vmatprep.subr.mxu0 0.0
        %1287 = vmatpush1.xpose.msra.mxu0 %v1214
        %1288 = vmatprep.subr.mxu0 0.0
        %1289 = vmatpush1.xpose.msra.mxu0 %v1211
        %1290 = vmatprep.subr.mxu0 0.0
        %1291 = vmatpush2.xpose.msra.mxu0 0.0
        %1292 = vmatprep.subr.mxu0 0.0
        %1293 = vmatpush2.xpose.msra.mxu0 0.0
        %1294 = vmatprep.subr.mxu0 0.0
        %1295 = vmatpush2.xpose.msra.mxu0 0.0
        %1296 = vmatprep.subr.mxu0 0.0
        %1297 = vmatpush2.xpose.msra.mxu0 0.0
        %1298 = vmatprep.subr.mxu0 0.0
        %1299 = vmatpush2.xpose.msra.mxu0 0.0
        %1300 = vmatprep.subr.mxu0 0.0
        %1301 = vmatpush2.xpose.msra.mxu0 0.0
        %1302 = vmatprep.subr.mxu0 0.0
        %1303 = vmatpush2.xpose.msra.mxu0 0.0
        %1304 = vmatprep.subr.mxu0 0.0
        %1305 = vmatpush2.xpose.msra.mxu0 0.0
        %1306 = vmatprep.subr.mxu0 0.0
        %1307 = vmatpush2.xpose.msra.mxu0 0.0
        %1308 = vmatprep.subr.mxu0 0.0
        %1309 = vmatpush2.xpose.msra.mxu0 0.0
        %1310 = vmatprep.subr.mxu0 0.0
        %1311 = vmatpush2.xpose.msra.mxu0 0.0
        %1312 = vmatprep.subr.mxu0 0.0
        %1313 = vmatpush2.xpose.msra.mxu0 0.0
        %1314 = vmatprep.subr.mxu0 0.0
        %1315 = vmatpush2.xpose.msra.mxu0 0.0
        %1316 = vmatprep.subr.mxu0 0.0
        %1317 = vmatpush2.xpose.msra.mxu0 0.0
        %1318 = vmatprep.subr.mxu0 0.0
        %1319 = vmatpush2.xpose.msra.mxu0 0.0
        %1320 = vmatprep.subr.mxu0 0.0
        %1321 = vmatpush2.xpose.msra.mxu0 0.0
        %1322 = vmatprep.mubr.f32.mxu0 0.0
        %1323 = vmatmul.mubr.f32.gmra.mxu0 %v1205
        %v1324 = vpop.f32.mrf.mxu0
        %v1325 = vadd.f32 0.0, %v1324
        %v1326 = vpop.f32.mrf.mxu0
        %1327 = vmatprep.mubr.f32.mxu0 0.0
        %1328 = vmatmul.mubr.f32.gmra.mxu0 %v1208
        %v1329 = vpop.f32.mrf.mxu0
        %v1330 = vadd.f32 0.0, %v1329
        %v1331 = vpop.f32.mrf.mxu0
        %1332 = vdwg.mxu0
        %1333 = vst [vmem:[%s285] sm:$0xff] %v1325
        %1334 = vst [vmem:[%s285 + $0x8] sm:$0xff] %v1330
        %s1335 = sand.u32 %s195, 1
        %s1336 = scalar_lea.sflag [#allocation5], %s1335
        %s1337 = sand.u32 %s195, 1
        %s1338 = smul.addr %s1337, 16
        %s1339 = scalar_lea.vmem [#allocation4], %s1338
        // Predicated region
        $region53: #{tpu_custom_call.1} parent=47 // pred_check
          %p1340 = pneg %p205
        $region54: #{tpu_custom_call.1} parent=47 // pred_check_branch
          %1342 = sbr.rel (%p1340) target = $region56
        $region55: #{tpu_custom_call.1} parent=47 // pred_region
          %s1343 = smul.u32 2, %s26
          %s1345 = ssub.s32 256, 256
          %1346 = vsyncadd %s1336, %s1345
          %s1347 = smul.addr %s25, 2
          %s1348 = sadd.s32 %s1343, %s1347
          %s1349 = smul.addr %s1348, 128
          %s1350 = scalar_lea.hbm %s7, %s1349
          %s1351 = sshll.u32 %s1339, 4
          %s1352 = int_to_ptr.vmem [resolvable:$true] %s1351
          %1357 = dma.vmem_to_hbm [thread:$0]  %s1352, 256, %s1350, %s1336, 128, 128, 8
        $region56: #{tpu_custom_call.1} parent=47 // pred_fallthru
          _
      $region48: #{tpu_custom_call.1} parent=5 // pred_fallthru
        _
      %p1358 = scmp.le.s32.totalorder 2, %s16
      // Predicated region
      $region57: #{tpu_custom_call.1} parent=5 // pred_check
        %p1359 = pneg %p1358
      $region58: #{tpu_custom_call.1} parent=5 // pred_check_branch
        %1361 = sbr.rel (%p1359) target = $region60
      $region59: #{tpu_custom_call.1} parent=5 // pred_region
        %s1362 = ssub.s32 %s16, 2
        // Predicated region
        $region61: #{tpu_custom_call.1} parent=59 // pred_check
          %p1363 = pneg %p211
        $region62: #{tpu_custom_call.1} parent=59 // pred_check_branch
          %1365 = sbr.rel (%p1363) target = $region64
        $region63: #{tpu_custom_call.1} parent=59 // pred_region
          %s1366 = sand.u32 %s196, 1
          %s1367 = scalar_lea.sflag [#allocation5], %s1366
          %s1368 = sand.u32 %s196, 1
          %s1369 = smul.addr %s1368, 16
          %s1370 = scalar_lea.vmem [#allocation4], %s1369
          %1371 = dma.done %s1367, 256
        $region64: #{tpu_custom_call.1} parent=59 // pred_fallthru
          _
      $region60: #{tpu_custom_call.1} parent=5 // pred_fallthru
        _
    $region6: #{tpu_custom_call.1} parent=1 // loop_footer
      %s20 = sadd.s32 1, %s16
    $region7: #{tpu_custom_call.1} parent=1 // loop_footer_branch
      %15 = sbr.rel target = $region3
    $region8: #{tpu_custom_call.1} parent=1 // loop_exit
      _
    %1372 = vsyncpa [#allocation5], 1
    %s1373 = scalar_lea.sflag [#allocation5], 1
    %1374 = vsyncpa %s1373, 1

</llo_original>
